<compile_context>
chip_gen: v6e
topology: v6e:2x2x1
jax: 0.10.0
libtpu: 0.0.40
codegen_flags: <defaults>
</compile_context>

<pallas_src>
import math

import jax
import jax.numpy as jnp
from jax import lax
from jax.experimental import pallas as pl
from jax.experimental.pallas import tpu as pltpu


def _round_up(x, m):
    return (x + m - 1) // m * m


def project_2d_to_3d(x2d, idx, *, w, h, d,
                     voxel_tile=512, pixel_chunk=256,
                     max_pixels_per_tile=None, compute_dtype=None):
    """Scatter-max projection of 2D features into a 3D voxel volume.

    x2d: (bs, C, H, W) float, idx: (bs, H*W) int -> (bs, C, w, h, d).

    max_pixels_per_tile: optional static bound on pixels mapping into one
      voxel tile.  If None it is derived from the data (host sync, so the
      wrapper itself is not jit-traceable in that mode).  If given, it MUST
      bound the true per-tile pixel count or pixels are dropped.
    compute_dtype: e.g. jnp.bfloat16 on v6e/v7x for fewer VALU vreg-ops;
      default keeps the input dtype (f32) for exact parity.  Keep f32 on v5e.
    """
    bs, c, H, W = x2d.shape
    P = H * W
    V = w * h * d
    VT = int(voxel_tile)
    PC = int(pixel_chunk)
    assert VT % 128 == 0, "voxel_tile must be a multiple of 128 (lane dense)"
    assert PC % 8 == 0, "pixel_chunk must be a multiple of 8 (sublanes)"

    V_pad = _round_up(V, VT)
    P_pad = _round_up(P, PC)
    n_vt = V_pad // VT
    n_pix_blocks = P_pad // PC

    cdt = jnp.dtype(compute_dtype) if compute_dtype is not None else jnp.dtype(x2d.dtype)

    # Sub-chunk of pixels per inner iteration: keep the (sp, VT) select/max
    # working set around ~32 vreg-tiles.
    sp = max(8, min(PC, (32 * 1024) // VT))
    sp = max(8, math.gcd(PC, sp))
    n_sub = PC // sp

    # Fully unroll the sub-chunk loop (register-resident running maxima) only
    # when the unrolled code size and the per-channel register footprint stay
    # small; otherwise use fori_loop + direct VMEM accumulation.
    unrolled = (n_sub * c <= 64) and (c * (VT // 128) <= 32)

    # ---- plain-JAX preprocessing: sort pixels by voxel id (scatter -> gather).
    idx_i32 = idx.reshape(bs, P).astype(jnp.int32)
    if P_pad > P:
        idx_full = jnp.concatenate(
            [idx_i32, jnp.full((bs, P_pad - P), V_pad, jnp.int32)], axis=1)
    else:
        idx_full = idx_i32
    order = jnp.argsort(idx_full, axis=1)                        # (bs, P_pad)
    sorted_idx = jnp.take_along_axis(idx_full, order, axis=1)    # (bs, P_pad)

    src = jnp.transpose(x2d.reshape(bs, c, P), (0, 2, 1))        # (bs, P, C)
    if P_pad > P:
        src = jnp.concatenate(
            [src, jnp.zeros((bs, P_pad - P, c), src.dtype)], axis=1)
    src_sorted = jnp.take_along_axis(src, order[..., None], axis=1)  # (bs, P_pad, C)
    sorted_idx3 = sorted_idx[..., None]                          # (bs, P_pad, 1)

    # Per-(batch, voxel-tile) pixel ranges in the sorted order.
    bounds = jnp.arange(n_vt + 1, dtype=jnp.int32) * VT          # (n_vt+1,)
    starts = jax.vmap(
        lambda s: jnp.searchsorted(s, bounds, side='left'))(sorted_idx)
    starts = starts.astype(jnp.int32)
    start = starts[:, :-1]                                       # (bs, n_vt)
    end = starts[:, 1:]                                          # (bs, n_vt)
    first_blk = jnp.clip(start // PC, 0, n_pix_blocks - 1).astype(jnp.int32)
    nblk = jnp.where(end > start,
                     (end - 1) // PC - start // PC + 1,
                     0).astype(jnp.int32)

    if max_pixels_per_tile is None:
        # Data-dependent grid extent (tight pruning); requires a host sync.
        max_chunks = max(1, int(jax.device_get(jnp.max(nblk))))
    else:
        max_chunks = pl.cdiv(int(max_pixels_per_tile), PC) + 1

    # Flattened 1-D scalar-prefetch tables (1-D SMEM avoids 2-D row padding).
    first_flat = first_blk.reshape(-1)
    nblk_flat = nblk.reshape(-1)

    def pix_index_map(b, j, p, first_ref, nblk_ref):
        t = b * n_vt + j
        nb = nblk_ref[t]
        # For p >= nb, clamp to the last needed block so no extra DMA happens.
        blk = first_ref[t] + jnp.minimum(p, jnp.maximum(nb - 1, 0))
        return (b, blk, 0)

    def out_index_map(b, j, p, first_ref, nblk_ref):
        return (b, 0, j)

    def kernel(first_ref, nblk_ref, idx_ref, src_ref, out_ref, acc_ref):
        # idx_ref: (1, PC, 1) int32 sorted voxel ids of this pixel block
        # src_ref: (1, PC, C)       sorted per-pixel features
        # out_ref: (1, C, VT)       voxel tile of the output (lane dense)
        # acc_ref: (C, VT) f32      running max, resident across pixel chunks
        b = pl.program_id(0)
        j = pl.program_id(1)
        p = pl.program_id(2)
        nb = nblk_ref[b * n_vt + j]

        @pl.when(p == 0)
        def _init():
            # 0-init == scatter_max into a zero buffer (the 0 joins the max).
            acc_ref[...] = jnp.zeros_like(acc_ref)

        @pl.when(p < nb)
        def _compute():
            vox_base = j * VT
            fill = jnp.zeros((), cdt)
            # Hoisted out of the sub-chunk loop: voxel-id iota for this tile.
            vox = vox_base + lax.broadcasted_iota(jnp.int32, (sp, VT), 1)

            if unrolled:
                # Register-resident running max per channel; a single
                # accumulator read-modify-write per channel per grid step.
                run = [jnp.zeros((1, VT), jnp.float32) for _ in range(c)]
                for s in range(n_sub):
                    off = s * sp
                    idx_sub = idx_ref[0, pl.ds(off, sp), :]              # (sp, 1)
                    msk = idx_sub == vox                                 # (sp, VT)
                    src_sub = src_ref[0, pl.ds(off, sp), :].astype(cdt)  # (sp, C)
                    # Mask is built once per sub-chunk, reused by all channels.
                    for ch in range(c):
                        col = src_sub[:, ch:ch + 1]                      # (sp, 1)
                        vals = jnp.where(msk, col, fill)                 # (sp, VT)
                        m = jnp.max(vals, axis=0, keepdims=True)         # (1, VT)
                        run[ch] = jnp.maximum(run[ch], m.astype(jnp.float32))
                for ch in range(c):
                    acc_ref[ch:ch + 1, :] = jnp.maximum(
                        acc_ref[ch:ch + 1, :], run[ch])
            else:
                def body(s, carry):
                    off = pl.multiple_of(s * sp, sp)
                    idx_sub = idx_ref[0, pl.ds(off, sp), :]              # (sp, 1)
                    msk = idx_sub == vox                                 # (sp, VT)
                    src_sub = src_ref[0, pl.ds(off, sp), :].astype(cdt)  # (sp, C)
                    for ch in range(c):
                        col = src_sub[:, ch:ch + 1]                      # (sp, 1)
                        vals = jnp.where(msk, col, fill)                 # (sp, VT)
                        m = jnp.max(vals, axis=0, keepdims=True)         # (1, VT)
                        acc_ref[ch:ch + 1, :] = jnp.maximum(
                            acc_ref[ch:ch + 1, :], m.astype(jnp.float32))
                    return carry

                lax.fori_loop(0, n_sub, body, 0)

        @pl.when(p == pl.num_programs(2) - 1)
        def _store():
            out_ref[0] = acc_ref[...].astype(out_ref.dtype)

    out = pl.pallas_call(
        kernel,
        out_shape=jax.ShapeDtypeStruct((bs, c, V_pad), x2d.dtype),
        grid_spec=pltpu.PrefetchScalarGridSpec(
            num_scalar_prefetch=2,
            grid=(bs, n_vt, max_chunks),
            in_specs=[
                pl.BlockSpec((1, PC, 1), pix_index_map),   # sorted voxel ids
                pl.BlockSpec((1, PC, c), pix_index_map),   # sorted features
            ],
            out_specs=pl.BlockSpec((1, c, VT), out_index_map),
            scratch_shapes=[pltpu.VMEM((c, VT), jnp.float32)],
        ),
        compiler_params=pltpu.CompilerParams(
            dimension_semantics=("parallel", "parallel", "arbitrary"),
            vmem_limit_bytes=32 * 1024 * 1024),
    )(first_flat, nblk_flat, sorted_idx3, src_sorted)

    return out[:, :, :V].reshape(bs, c, w, h, d)


if __name__ == "__main__":
    # Small shapes consistent with the module (production 240x144x240 volume
    # shrunk to 16x16x8, image to 32x32) — exercises multiple voxel tiles and
    # multiple pruned pixel chunks per tile.
    bs, c, H, W = 2, 4, 32, 32
    w3, h3, d3 = 16, 16, 8
    V = w3 * h3 * d3
    P = H * W

    key = jax.random.PRNGKey(0)
    kx, ki = jax.random.split(key)
    x2d = jax.random.normal(kx, (bs, c, H, W), dtype=jnp.float32)
    idx = jax.random.randint(ki, (bs, P), 0, V, dtype=jnp.int32)

    x3d = project_2d_to_3d(x2d, idx, w=w3, h=h3, d=d3)
    x3d = jax.block_until_ready(x3d)
    assert x3d.shape == (bs, c, w3, h3, d3)

    # Pure-JAX reference: scatter-max into a zero buffer (0 joins the max).
    src_flat = x2d.reshape(bs, c, P)
    ref = jnp.zeros((bs, c, V), jnp.float32)
    for b in range(bs):
        for ch in range(c):
            ref = ref.at[b, ch, idx[b]].max(src_flat[b, ch])
    ref = ref.reshape(bs, c, w3, h3, d3)

    assert jnp.allclose(x3d, ref, atol=1e-6, rtol=1e-6), "mismatch vs reference"
    print("KERNEL_OK")
</pallas_src>

<mosaic_0001>
module attributes {stable_mosaic.version = 11 : i64} {
  func.func @kernel(%arg0: i32, %arg1: i32, %arg2: i32, %arg3: memref<8xi32, #tpu.memory_space<smem>>, %arg4: memref<8xi32, #tpu.memory_space<smem>>, %arg5: memref<1x256x1xi32, #tpu.memory_space<vmem>>, %arg6: memref<1x256x4xf32, #tpu.memory_space<vmem>>, %arg7: memref<1x4x512xf32, #tpu.memory_space<vmem>>, %arg8: memref<4x512xf32, #tpu.memory_space<vmem>>) attributes {dimension_semantics = [#tpu.dimension_semantics<parallel>, #tpu.dimension_semantics<parallel>, #tpu.dimension_semantics<arbitrary>], iteration_bounds = array<i64: 2, 4, 3>, scalar_prefetch = 2 : i64, scratch_operands = 1 : i64, tpu.core_type = #tpu.core_type<tc>, window_params = [{transform_indices = @transform_0, window_bounds = array<i64: 1, 256, 1>}, {transform_indices = @transform_1, window_bounds = array<i64: 1, 256, 4>}, {transform_indices = @transform_2, window_bounds = array<i64: 1, 4, 512>}]} {
    %c4_i32 = arith.constant 4 : i32
    %0 = arith.muli %arg0, %c4_i32 : i32
    %1 = arith.addi %0, %arg1 : i32
    %2 = arith.index_cast %1 : i32 to index
    %3 = memref.load %arg4[%2] : memref<8xi32, #tpu.memory_space<smem>>
    %c0_i32 = arith.constant 0 : i32
    %4 = arith.cmpi eq, %arg2, %c0_i32 : i32
    %5 = arith.extui %4 : i1 to i32
    %c0_i32_0 = arith.constant 0 : i32
    %6 = arith.cmpi ne, %5, %c0_i32_0 : i32
    scf.if %6 {
      %cst = arith.constant 0.000000e+00 : f32
      %13 = vector.broadcast %cst : f32 to vector<4x512xf32>
      %c0 = arith.constant 0 : index
      %c0_3 = arith.constant 0 : index
      %14 = vector.load %arg8[%c0, %c0_3] : memref<4x512xf32, #tpu.memory_space<vmem>>, vector<4x512xf32>
      tpu.vector_store %arg8[%c0, %c0_3], %13 {strides = array<i32>} : memref<4x512xf32, #tpu.memory_space<vmem>>, vector<4x512xf32>,
    } else {
    }
    %7 = arith.cmpi slt, %arg2, %3 : i32
    %8 = arith.extui %7 : i1 to i32
    %c0_i32_1 = arith.constant 0 : i32
    %9 = arith.cmpi ne, %8, %c0_i32_1 : i32
    scf.if %9 {
      %c512_i32 = arith.constant 512 : i32
      %13 = arith.muli %arg1, %c512_i32 : i32
      %14 = tpu.iota {dimensions = array<i32: 1>} : vector<64x512xi32>
      %15 = vector.broadcast %13 : i32 to vector<64x512xi32>
      %16 = arith.addi %15, %14 : vector<64x512xi32>
      %cst = arith.constant 0.000000e+00 : f32
      %17 = vector.broadcast %cst : f32 to vector<1x512xf32>
      %cst_3 = arith.constant 0.000000e+00 : f32
      %18 = vector.broadcast %cst_3 : f32 to vector<1x512xf32>
      %cst_4 = arith.constant 0.000000e+00 : f32
      %19 = vector.broadcast %cst_4 : f32 to vector<1x512xf32>
      %cst_5 = arith.constant 0.000000e+00 : f32
      %20 = vector.broadcast %cst_5 : f32 to vector<1x512xf32>
      %c0 = arith.constant 0 : index
      %c0_6 = arith.constant 0 : index
      %c0_7 = arith.constant 0 : index
      %21 = vector.load %arg5[%c0, %c0_6, %c0_7] : memref<1x256x1xi32, #tpu.memory_space<vmem>>, vector<1x64x1xi32>
      %22 = vector.shape_cast %21 : vector<1x64x1xi32> to vector<64x1xi32>
      %23 = vector.broadcast %22 : vector<64x1xi32> to vector<64x512xi32>
      %24 = arith.cmpi eq, %23, %16 : vector<64x512xi32>
      %c0_8 = arith.constant 0 : index
      %c0_9 = arith.constant 0 : index
      %c0_10 = arith.constant 0 : index
      %25 = vector.load %arg6[%c0_8, %c0_9, %c0_10] : memref<1x256x4xf32, #tpu.memory_space<vmem>>, vector<1x64x4xf32>
      %26 = vector.shape_cast %25 : vector<1x64x4xf32> to vector<64x4xf32>
      %27 = vector.extract_strided_slice %26 {offsets = [0, 0], sizes = [64, 1], strides = [1, 1]} : vector<64x4xf32> to vector<64x1xf32>
      %cst_11 = arith.constant 0.000000e+00 : f32
      %28 = vector.shape_cast %27 : vector<64x1xf32> to vector<64x1xf32>
      %29 = vector.broadcast %28 : vector<64x1xf32> to vector<64x512xf32>
      %30 = vector.broadcast %cst_11 : f32 to vector<64x512xf32>
      %31 = arith.select %24, %29, %30 : vector<64x512xi1>, vector<64x512xf32>
      %cst_12 = arith.constant dense<0xFF800000> : vector<512xf32>
      %32 = vector.multi_reduction <maximumf>, %31, %cst_12 [0] : vector<64x512xf32> to vector<512xf32>
      %33 = vector.shape_cast %32 : vector<512xf32> to vector<1x512xf32>
      %34 = arith.maximumf %17, %33 : vector<1x512xf32>
      %35 = vector.extract_strided_slice %26 {offsets = [0, 1], sizes = [64, 1], strides = [1, 1]} : vector<64x4xf32> to vector<64x1xf32>
      %cst_13 = arith.constant 0.000000e+00 : f32
      %36 = vector.shape_cast %35 : vector<64x1xf32> to vector<64x1xf32>
      %37 = vector.broadcast %36 : vector<64x1xf32> to vector<64x512xf32>
      %38 = vector.broadcast %cst_13 : f32 to vector<64x512xf32>
      %39 = arith.select %24, %37, %38 : vector<64x512xi1>, vector<64x512xf32>
      %cst_14 = arith.constant dense<0xFF800000> : vector<512xf32>
      %40 = vector.multi_reduction <maximumf>, %39, %cst_14 [0] : vector<64x512xf32> to vector<512xf32>
      %41 = vector.shape_cast %40 : vector<512xf32> to vector<1x512xf32>
      %42 = arith.maximumf %18, %41 : vector<1x512xf32>
      %43 = vector.extract_strided_slice %26 {offsets = [0, 2], sizes = [64, 1], strides = [1, 1]} : vector<64x4xf32> to vector<64x1xf32>
      %cst_15 = arith.constant 0.000000e+00 : f32
      %44 = vector.shape_cast %43 : vector<64x1xf32> to vector<64x1xf32>
      %45 = vector.broadcast %44 : vector<64x1xf32> to vector<64x512xf32>
      %46 = vector.broadcast %cst_15 : f32 to vector<64x512xf32>
      %47 = arith.select %24, %45, %46 : vector<64x512xi1>, vector<64x512xf32>
      %cst_16 = arith.constant dense<0xFF800000> : vector<512xf32>
      %48 = vector.multi_reduction <maximumf>, %47, %cst_16 [0] : vector<64x512xf32> to vector<512xf32>
      %49 = vector.shape_cast %48 : vector<512xf32> to vector<1x512xf32>
      %50 = arith.maximumf %19, %49 : vector<1x512xf32>
      %51 = vector.extract_strided_slice %26 {offsets = [0, 3], sizes = [64, 1], strides = [1, 1]} : vector<64x4xf32> to vector<64x1xf32>
      %cst_17 = arith.constant 0.000000e+00 : f32
      %52 = vector.shape_cast %51 : vector<64x1xf32> to vector<64x1xf32>
      %53 = vector.broadcast %52 : vector<64x1xf32> to vector<64x512xf32>
      %54 = vector.broadcast %cst_17 : f32 to vector<64x512xf32>
      %55 = arith.select %24, %53, %54 : vector<64x512xi1>, vector<64x512xf32>
      %cst_18 = arith.constant dense<0xFF800000> : vector<512xf32>
      %56 = vector.multi_reduction <maximumf>, %55, %cst_18 [0] : vector<64x512xf32> to vector<512xf32>
      %57 = vector.shape_cast %56 : vector<512xf32> to vector<1x512xf32>
      %58 = arith.maximumf %20, %57 : vector<1x512xf32>
      %c0_19 = arith.constant 0 : index
      %c64 = arith.constant 64 : index
      %c0_20 = arith.constant 0 : index
      %59 = vector.load %arg5[%c0_19, %c64, %c0_20] : memref<1x256x1xi32, #tpu.memory_space<vmem>>, vector<1x64x1xi32>
      %60 = vector.shape_cast %59 : vector<1x64x1xi32> to vector<64x1xi32>
      %61 = vector.broadcast %60 : vector<64x1xi32> to vector<64x512xi32>
      %62 = arith.cmpi eq, %61, %16 : vector<64x512xi32>
      %c0_21 = arith.constant 0 : index
      %c64_22 = arith.constant 64 : index
      %c0_23 = arith.constant 0 : index
      %63 = vector.load %arg6[%c0_21, %c64_22, %c0_23] : memref<1x256x4xf32, #tpu.memory_space<vmem>>, vector<1x64x4xf32>
      %64 = vector.shape_cast %63 : vector<1x64x4xf32> to vector<64x4xf32>
      %65 = vector.extract_strided_slice %64 {offsets = [0, 0], sizes = [64, 1], strides = [1, 1]} : vector<64x4xf32> to vector<64x1xf32>
      %cst_24 = arith.constant 0.000000e+00 : f32
      %66 = vector.shape_cast %65 : vector<64x1xf32> to vector<64x1xf32>
      %67 = vector.broadcast %66 : vector<64x1xf32> to vector<64x512xf32>
      %68 = vector.broadcast %cst_24 : f32 to vector<64x512xf32>
      %69 = arith.select %62, %67, %68 : vector<64x512xi1>, vector<64x512xf32>
      %cst_25 = arith.constant dense<0xFF800000> : vector<512xf32>
      %70 = vector.multi_reduction <maximumf>, %69, %cst_25 [0] : vector<64x512xf32> to vector<512xf32>
      %71 = vector.shape_cast %70 : vector<512xf32> to vector<1x512xf32>
      %72 = arith.maximumf %34, %71 : vector<1x512xf32>
      %73 = vector.extract_strided_slice %64 {offsets = [0, 1], sizes = [64, 1], strides = [1, 1]} : vector<64x4xf32> to vector<64x1xf32>
      %cst_26 = arith.constant 0.000000e+00 : f32
      %74 = vector.shape_cast %73 : vector<64x1xf32> to vector<64x1xf32>
      %75 = vector.broadcast %74 : vector<64x1xf32> to vector<64x512xf32>
      %76 = vector.broadcast %cst_26 : f32 to vector<64x512xf32>
      %77 = arith.select %62, %75, %76 : vector<64x512xi1>, vector<64x512xf32>
      %cst_27 = arith.constant dense<0xFF800000> : vector<512xf32>
      %78 = vector.multi_reduction <maximumf>, %77, %cst_27 [0] : vector<64x512xf32> to vector<512xf32>
      %79 = vector.shape_cast %78 : vector<512xf32> to vector<1x512xf32>
      %80 = arith.maximumf %42, %79 : vector<1x512xf32>
      %81 = vector.extract_strided_slice %64 {offsets = [0, 2], sizes = [64, 1], strides = [1, 1]} : vector<64x4xf32> to vector<64x1xf32>
      %cst_28 = arith.constant 0.000000e+00 : f32
      %82 = vector.shape_cast %81 : vector<64x1xf32> to vector<64x1xf32>
      %83 = vector.broadcast %82 : vector<64x1xf32> to vector<64x512xf32>
      %84 = vector.broadcast %cst_28 : f32 to vector<64x512xf32>
      %85 = arith.select %62, %83, %84 : vector<64x512xi1>, vector<64x512xf32>
      %cst_29 = arith.constant dense<0xFF800000> : vector<512xf32>
      %86 = vector.multi_reduction <maximumf>, %85, %cst_29 [0] : vector<64x512xf32> to vector<512xf32>
      %87 = vector.shape_cast %86 : vector<512xf32> to vector<1x512xf32>
      %88 = arith.maximumf %50, %87 : vector<1x512xf32>
      %89 = vector.extract_strided_slice %64 {offsets = [0, 3], sizes = [64, 1], strides = [1, 1]} : vector<64x4xf32> to vector<64x1xf32>
      %cst_30 = arith.constant 0.000000e+00 : f32
      %90 = vector.shape_cast %89 : vector<64x1xf32> to vector<64x1xf32>
      %91 = vector.broadcast %90 : vector<64x1xf32> to vector<64x512xf32>
      %92 = vector.broadcast %cst_30 : f32 to vector<64x512xf32>
      %93 = arith.select %62, %91, %92 : vector<64x512xi1>, vector<64x512xf32>
      %cst_31 = arith.constant dense<0xFF800000> : vector<512xf32>
      %94 = vector.multi_reduction <maximumf>, %93, %cst_31 [0] : vector<64x512xf32> to vector<512xf32>
      %95 = vector.shape_cast %94 : vector<512xf32> to vector<1x512xf32>
      %96 = arith.maximumf %58, %95 : vector<1x512xf32>
      %c0_32 = arith.constant 0 : index
      %c128 = arith.constant 128 : index
      %c0_33 = arith.constant 0 : index
      %97 = vector.load %arg5[%c0_32, %c128, %c0_33] : memref<1x256x1xi32, #tpu.memory_space<vmem>>, vector<1x64x1xi32>
      %98 = vector.shape_cast %97 : vector<1x64x1xi32> to vector<64x1xi32>
      %99 = vector.broadcast %98 : vector<64x1xi32> to vector<64x512xi32>
      %100 = arith.cmpi eq, %99, %16 : vector<64x512xi32>
      %c0_34 = arith.constant 0 : index
      %c128_35 = arith.constant 128 : index
      %c0_36 = arith.constant 0 : index
      %101 = vector.load %arg6[%c0_34, %c128_35, %c0_36] : memref<1x256x4xf32, #tpu.memory_space<vmem>>, vector<1x64x4xf32>
      %102 = vector.shape_cast %101 : vector<1x64x4xf32> to vector<64x4xf32>
      %103 = vector.extract_strided_slice %102 {offsets = [0, 0], sizes = [64, 1], strides = [1, 1]} : vector<64x4xf32> to vector<64x1xf32>
      %cst_37 = arith.constant 0.000000e+00 : f32
      %104 = vector.shape_cast %103 : vector<64x1xf32> to vector<64x1xf32>
      %105 = vector.broadcast %104 : vector<64x1xf32> to vector<64x512xf32>
      %106 = vector.broadcast %cst_37 : f32 to vector<64x512xf32>
      %107 = arith.select %100, %105, %106 : vector<64x512xi1>, vector<64x512xf32>
      %cst_38 = arith.constant dense<0xFF800000> : vector<512xf32>
      %108 = vector.multi_reduction <maximumf>, %107, %cst_38 [0] : vector<64x512xf32> to vector<512xf32>
      %109 = vector.shape_cast %108 : vector<512xf32> to vector<1x512xf32>
      %110 = arith.maximumf %72, %109 : vector<1x512xf32>
      %111 = vector.extract_strided_slice %102 {offsets = [0, 1], sizes = [64, 1], strides = [1, 1]} : vector<64x4xf32> to vector<64x1xf32>
      %cst_39 = arith.constant 0.000000e+00 : f32
      %112 = vector.shape_cast %111 : vector<64x1xf32> to vector<64x1xf32>
      %113 = vector.broadcast %112 : vector<64x1xf32> to vector<64x512xf32>
      %114 = vector.broadcast %cst_39 : f32 to vector<64x512xf32>
      %115 = arith.select %100, %113, %114 : vector<64x512xi1>, vector<64x512xf32>
      %cst_40 = arith.constant dense<0xFF800000> : vector<512xf32>
      %116 = vector.multi_reduction <maximumf>, %115, %cst_40 [0] : vector<64x512xf32> to vector<512xf32>
      %117 = vector.shape_cast %116 : vector<512xf32> to vector<1x512xf32>
      %118 = arith.maximumf %80, %117 : vector<1x512xf32>
      %119 = vector.extract_strided_slice %102 {offsets = [0, 2], sizes = [64, 1], strides = [1, 1]} : vector<64x4xf32> to vector<64x1xf32>
      %cst_41 = arith.constant 0.000000e+00 : f32
      %120 = vector.shape_cast %119 : vector<64x1xf32> to vector<64x1xf32>
      %121 = vector.broadcast %120 : vector<64x1xf32> to vector<64x512xf32>
      %122 = vector.broadcast %cst_41 : f32 to vector<64x512xf32>
      %123 = arith.select %100, %121, %122 : vector<64x512xi1>, vector<64x512xf32>
      %cst_42 = arith.constant dense<0xFF800000> : vector<512xf32>
      %124 = vector.multi_reduction <maximumf>, %123, %cst_42 [0] : vector<64x512xf32> to vector<512xf32>
      %125 = vector.shape_cast %124 : vector<512xf32> to vector<1x512xf32>
      %126 = arith.maximumf %88, %125 : vector<1x512xf32>
      %127 = vector.extract_strided_slice %102 {offsets = [0, 3], sizes = [64, 1], strides = [1, 1]} : vector<64x4xf32> to vector<64x1xf32>
      %cst_43 = arith.constant 0.000000e+00 : f32
      %128 = vector.shape_cast %127 : vector<64x1xf32> to vector<64x1xf32>
      %129 = vector.broadcast %128 : vector<64x1xf32> to vector<64x512xf32>
      %130 = vector.broadcast %cst_43 : f32 to vector<64x512xf32>
      %131 = arith.select %100, %129, %130 : vector<64x512xi1>, vector<64x512xf32>
      %cst_44 = arith.constant dense<0xFF800000> : vector<512xf32>
      %132 = vector.multi_reduction <maximumf>, %131, %cst_44 [0] : vector<64x512xf32> to vector<512xf32>
      %133 = vector.shape_cast %132 : vector<512xf32> to vector<1x512xf32>
      %134 = arith.maximumf %96, %133 : vector<1x512xf32>
      %c0_45 = arith.constant 0 : index
      %c192 = arith.constant 192 : index
      %c0_46 = arith.constant 0 : index
      %135 = vector.load %arg5[%c0_45, %c192, %c0_46] : memref<1x256x1xi32, #tpu.memory_space<vmem>>, vector<1x64x1xi32>
      %136 = vector.shape_cast %135 : vector<1x64x1xi32> to vector<64x1xi32>
      %137 = vector.broadcast %136 : vector<64x1xi32> to vector<64x512xi32>
      %138 = arith.cmpi eq, %137, %16 : vector<64x512xi32>
      %c0_47 = arith.constant 0 : index
      %c192_48 = arith.constant 192 : index
      %c0_49 = arith.constant 0 : index
      %139 = vector.load %arg6[%c0_47, %c192_48, %c0_49] : memref<1x256x4xf32, #tpu.memory_space<vmem>>, vector<1x64x4xf32>
      %140 = vector.shape_cast %139 : vector<1x64x4xf32> to vector<64x4xf32>
      %141 = vector.extract_strided_slice %140 {offsets = [0, 0], sizes = [64, 1], strides = [1, 1]} : vector<64x4xf32> to vector<64x1xf32>
      %cst_50 = arith.constant 0.000000e+00 : f32
      %142 = vector.shape_cast %141 : vector<64x1xf32> to vector<64x1xf32>
      %143 = vector.broadcast %142 : vector<64x1xf32> to vector<64x512xf32>
      %144 = vector.broadcast %cst_50 : f32 to vector<64x512xf32>
      %145 = arith.select %138, %143, %144 : vector<64x512xi1>, vector<64x512xf32>
      %cst_51 = arith.constant dense<0xFF800000> : vector<512xf32>
      %146 = vector.multi_reduction <maximumf>, %145, %cst_51 [0] : vector<64x512xf32> to vector<512xf32>
      %147 = vector.shape_cast %146 : vector<512xf32> to vector<1x512xf32>
      %148 = arith.maximumf %110, %147 : vector<1x512xf32>
      %149 = vector.extract_strided_slice %140 {offsets = [0, 1], sizes = [64, 1], strides = [1, 1]} : vector<64x4xf32> to vector<64x1xf32>
      %cst_52 = arith.constant 0.000000e+00 : f32
      %150 = vector.shape_cast %149 : vector<64x1xf32> to vector<64x1xf32>
      %151 = vector.broadcast %150 : vector<64x1xf32> to vector<64x512xf32>
      %152 = vector.broadcast %cst_52 : f32 to vector<64x512xf32>
      %153 = arith.select %138, %151, %152 : vector<64x512xi1>, vector<64x512xf32>
      %cst_53 = arith.constant dense<0xFF800000> : vector<512xf32>
      %154 = vector.multi_reduction <maximumf>, %153, %cst_53 [0] : vector<64x512xf32> to vector<512xf32>
      %155 = vector.shape_cast %154 : vector<512xf32> to vector<1x512xf32>
      %156 = arith.maximumf %118, %155 : vector<1x512xf32>
      %157 = vector.extract_strided_slice %140 {offsets = [0, 2], sizes = [64, 1], strides = [1, 1]} : vector<64x4xf32> to vector<64x1xf32>
      %cst_54 = arith.constant 0.000000e+00 : f32
      %158 = vector.shape_cast %157 : vector<64x1xf32> to vector<64x1xf32>
      %159 = vector.broadcast %158 : vector<64x1xf32> to vector<64x512xf32>
      %160 = vector.broadcast %cst_54 : f32 to vector<64x512xf32>
      %161 = arith.select %138, %159, %160 : vector<64x512xi1>, vector<64x512xf32>
      %cst_55 = arith.constant dense<0xFF800000> : vector<512xf32>
      %162 = vector.multi_reduction <maximumf>, %161, %cst_55 [0] : vector<64x512xf32> to vector<512xf32>
      %163 = vector.shape_cast %162 : vector<512xf32> to vector<1x512xf32>
      %164 = arith.maximumf %126, %163 : vector<1x512xf32>
      %165 = vector.extract_strided_slice %140 {offsets = [0, 3], sizes = [64, 1], strides = [1, 1]} : vector<64x4xf32> to vector<64x1xf32>
      %cst_56 = arith.constant 0.000000e+00 : f32
      %166 = vector.shape_cast %165 : vector<64x1xf32> to vector<64x1xf32>
      %167 = vector.broadcast %166 : vector<64x1xf32> to vector<64x512xf32>
      %168 = vector.broadcast %cst_56 : f32 to vector<64x512xf32>
      %169 = arith.select %138, %167, %168 : vector<64x512xi1>, vector<64x512xf32>
      %cst_57 = arith.constant dense<0xFF800000> : vector<512xf32>
      %170 = vector.multi_reduction <maximumf>, %169, %cst_57 [0] : vector<64x512xf32> to vector<512xf32>
      %171 = vector.shape_cast %170 : vector<512xf32> to vector<1x512xf32>
      %172 = arith.maximumf %134, %171 : vector<1x512xf32>
      %c0_58 = arith.constant 0 : index
      %c0_59 = arith.constant 0 : index
      %173 = vector.load %arg8[%c0_58, %c0_59] : memref<4x512xf32, #tpu.memory_space<vmem>>, vector<1x512xf32>
      %174 = arith.maximumf %173, %148 : vector<1x512xf32>
      %c0_60 = arith.constant 0 : index
      %c0_61 = arith.constant 0 : index
      %175 = vector.load %arg8[%c0_60, %c0_61] : memref<4x512xf32, #tpu.memory_space<vmem>>, vector<1x512xf32>
      tpu.vector_store %arg8[%c0_60, %c0_61], %174 {strides = array<i32>} : memref<4x512xf32, #tpu.memory_space<vmem>>, vector<1x512xf32>,
      %c1 = arith.constant 1 : index
      %c0_62 = arith.constant 0 : index
      %176 = vector.load %arg8[%c1, %c0_62] : memref<4x512xf32, #tpu.memory_space<vmem>>, vector<1x512xf32>
      %177 = arith.maximumf %176, %156 : vector<1x512xf32>
      %c1_63 = arith.constant 1 : index
      %c0_64 = arith.constant 0 : index
      %178 = vector.load %arg8[%c1_63, %c0_64] : memref<4x512xf32, #tpu.memory_space<vmem>>, vector<1x512xf32>
      tpu.vector_store %arg8[%c1_63, %c0_64], %177 {strides = array<i32>} : memref<4x512xf32, #tpu.memory_space<vmem>>, vector<1x512xf32>,
      %c2 = arith.constant 2 : index
      %c0_65 = arith.constant 0 : index
      %179 = vector.load %arg8[%c2, %c0_65] : memref<4x512xf32, #tpu.memory_space<vmem>>, vector<1x512xf32>
      %180 = arith.maximumf %179, %164 : vector<1x512xf32>
      %c2_66 = arith.constant 2 : index
      %c0_67 = arith.constant 0 : index
      %181 = vector.load %arg8[%c2_66, %c0_67] : memref<4x512xf32, #tpu.memory_space<vmem>>, vector<1x512xf32>
      tpu.vector_store %arg8[%c2_66, %c0_67], %180 {strides = array<i32>} : memref<4x512xf32, #tpu.memory_space<vmem>>, vector<1x512xf32>,
      %c3 = arith.constant 3 : index
      %c0_68 = arith.constant 0 : index
      %182 = vector.load %arg8[%c3, %c0_68] : memref<4x512xf32, #tpu.memory_space<vmem>>, vector<1x512xf32>
      %183 = arith.maximumf %182, %172 : vector<1x512xf32>
      %c3_69 = arith.constant 3 : index
      %c0_70 = arith.constant 0 : index
      %184 = vector.load %arg8[%c3_69, %c0_70] : memref<4x512xf32, #tpu.memory_space<vmem>>, vector<1x512xf32>
      tpu.vector_store %arg8[%c3_69, %c0_70], %183 {strides = array<i32>} : memref<4x512xf32, #tpu.memory_space<vmem>>, vector<1x512xf32>,
    } else {
    }
    %c2_i32 = arith.constant 2 : i32
    %10 = arith.cmpi eq, %arg2, %c2_i32 : i32
    %11 = arith.extui %10 : i1 to i32
    %c0_i32_2 = arith.constant 0 : i32
    %12 = arith.cmpi ne, %11, %c0_i32_2 : i32
    scf.if %12 {
      %c0 = arith.constant 0 : index
      %c0_3 = arith.constant 0 : index
      %13 = vector.load %arg8[%c0, %c0_3] : memref<4x512xf32, #tpu.memory_space<vmem>>, vector<4x512xf32>
      %c0_4 = arith.constant 0 : index
      %c0_5 = arith.constant 0 : index
      %c0_6 = arith.constant 0 : index
      %14 = vector.load %arg7[%c0_4, %c0_5, %c0_6] : memref<1x4x512xf32, #tpu.memory_space<vmem>>, vector<1x4x512xf32>
      %15 = vector.shape_cast %14 : vector<1x4x512xf32> to vector<4x512xf32>
      %16 = vector.shape_cast %13 : vector<4x512xf32> to vector<1x4x512xf32>
      tpu.vector_store %arg7[%c0_4, %c0_5, %c0_6], %16 {strides = array<i32>} : memref<1x4x512xf32, #tpu.memory_space<vmem>>, vector<1x4x512xf32>,
    } else {
    }
    return
  }
  func.func @transform_0(%arg0: i32, %arg1: i32, %arg2: i32, %arg3: memref<8xi32, #tpu.memory_space<smem>>, %arg4: memref<8xi32, #tpu.memory_space<smem>>) -> (i32, i32, i32) {
    %c4_i32 = arith.constant 4 : i32
    %0 = arith.muli %arg0, %c4_i32 : i32
    %1 = arith.addi %0, %arg1 : i32
    %2 = arith.index_cast %1 : i32 to index
    %3 = memref.load %arg4[%2] : memref<8xi32, #tpu.memory_space<smem>>
    %4 = arith.index_cast %1 : i32 to index
    %5 = memref.load %arg3[%4] : memref<8xi32, #tpu.memory_space<smem>>
    %c1_i32 = arith.constant 1 : i32
    %6 = arith.subi %3, %c1_i32 : i32
    %c0_i32 = arith.constant 0 : i32
    %7 = arith.maxsi %6, %c0_i32 : i32
    %8 = arith.minsi %arg2, %7 : i32
    %9 = arith.addi %5, %8 : i32
    %c0_i32_0 = arith.constant 0 : i32
    %c0_i32_1 = arith.constant 0 : i32
    return %arg0, %9, %c0_i32_0 : i32, i32, i32
  }
  func.func @transform_1(%arg0: i32, %arg1: i32, %arg2: i32, %arg3: memref<8xi32, #tpu.memory_space<smem>>, %arg4: memref<8xi32, #tpu.memory_space<smem>>) -> (i32, i32, i32) {
    %c4_i32 = arith.constant 4 : i32
    %0 = arith.muli %arg0, %c4_i32 : i32
    %1 = arith.addi %0, %arg1 : i32
    %2 = arith.index_cast %1 : i32 to index
    %3 = memref.load %arg4[%2] : memref<8xi32, #tpu.memory_space<smem>>
    %4 = arith.index_cast %1 : i32 to index
    %5 = memref.load %arg3[%4] : memref<8xi32, #tpu.memory_space<smem>>
    %c1_i32 = arith.constant 1 : i32
    %6 = arith.subi %3, %c1_i32 : i32
    %c0_i32 = arith.constant 0 : i32
    %7 = arith.maxsi %6, %c0_i32 : i32
    %8 = arith.minsi %arg2, %7 : i32
    %9 = arith.addi %5, %8 : i32
    %c0_i32_0 = arith.constant 0 : i32
    %c0_i32_1 = arith.constant 0 : i32
    return %arg0, %9, %c0_i32_0 : i32, i32, i32
  }
  func.func @transform_2(%arg0: i32, %arg1: i32, %arg2: i32, %arg3: memref<8xi32, #tpu.memory_space<smem>>, %arg4: memref<8xi32, #tpu.memory_space<smem>>) -> (i32, i32, i32) {
    %c0_i32 = arith.constant 0 : i32
    %c0_i32_0 = arith.constant 0 : i32
    return %arg0, %c0_i32, %arg1 : i32, i32, i32
  }
}

</mosaic_0001>

<llo_original>
// kernel: tpu_custom_call.1
$region0: #{tpu_custom_call.1}
  #allocation0 [shape = 'u32[]', space=smem, size = 0x4, offset = 0x4, fixed_abs, tag = 'smem constant byte address 0x4 - core index']
  #allocation1 [shape = 'u32[144,128]{1,0:T(1,128)}', space=vmem, size = 0x12000, scoped, tag = 'internal scratch']
  #allocation2 [shape = 'f32[4,512]{1,0:T(4,128)}', space=vmem, size = 0x2000, scoped, tag = 'scratch operand']
  #allocation3 [shape = 's32[1]{0}', space=sflag, size = 0x4, scoped, tag = 'scoped memory for tpu_custom_call.1']
  #allocation4 [shape = 'u8[512]{0}', space=smem, size = 0x200, scoped, tag = 'prefetched SMEM operand 0']
  #allocation5 [shape = 'u8[512]{0}', space=smem, size = 0x200, scoped, tag = 'prefetched SMEM operand 1']
  %s0 = inlined_call_operand.vmem [shape: s32[8], index: 0, kind: input, shape index: {}]
  %s1 = inlined_call_operand.vmem [shape: s32[8], index: 1, kind: input, shape index: {}]
  %s2 = inlined_call_operand.vmem [shape: s32[2,1024,1], index: 2, kind: input, shape index: {}]
  %s3 = inlined_call_operand.vmem [shape: f32[2,1024,4], index: 3, kind: input, shape index: {}]
  %s4 = inlined_call_operand.hbm [shape: f32[2,4,2048], index: 4, kind: output, shape index: {}]
  %s5 = sld [smem:[#allocation0]]
  $region53: #{tpu_custom_call.1} parent=0
    _
  %s7 = ssub.s32 1, %s5
  %s8 = scalar_select 0, %s7, %s5
  %s9 = sshll.u32 %s0, 4
  %s10 = int_to_ptr.vmem [resolvable:$true] %s9
  %12 = dma.vmem_to_smem %s10, 16, [#allocation4], [#allocation3]
  %s13 = sshll.u32 %s1, 4
  %s14 = int_to_ptr.vmem [resolvable:$true] %s13
  %16 = dma.vmem_to_smem %s14, 16, [#allocation5], [#allocation3]
  %17 = dma.done [#allocation3], 32
  %18 = sfence
  $region1: #{tpu_custom_call.1} parent=0
    #allocation6 [shape = 'u8[16384]{0}', space=vmem, size = 0x4000, scoped, tag = 'output window, operand 0']
    #allocation7 [shape = 's32[2]{0}', space=sflag, size = 0x8, scoped, tag = 'scoped memory for tpu_custom_call.1']
    %19 = vsyncpa [#allocation7], 0
    %s20 = scalar_lea.sflag [#allocation7], 1
    %21 = vsyncpa %s20, 0
    loop: start=0, step=1, limit=26
    $region2: #{tpu_custom_call.1} parent=1 // loop_pre_header
      _
    $region3: #{tpu_custom_call.1} parent=1 // loop_header
      %s23 = sphi 0, %s27
      %p24 = scmp.ge.s32.totalorder %s23, 26
      %s30 = sphi 0, %s49
      %s31 = sphi 0, %s45
      %s32 = sphi 0, %s41
      %s33 = sphi 0, %s30
      %s34 = sphi 0, %s31
      %s35 = sphi 0, %s32
      %s36 = sphi 0, %s33
      %s37 = sphi 0, %s34
      %s38 = sphi 0, %s35
      %s74 = sphi 0, %s76
      %s77 = sphi 0, %s74
      %s78 = sphi 0, %s77
      %s94 = sphi 0, %s78
      %s122 = sphi 0, %s124
      %s125 = sphi 0, %s122
      %s126 = sphi 0, %s125
      %s142 = sphi 0, %s126
      %s150 = sphi 0, %s152
      %s153 = sphi 0, %s150
      %s154 = sphi 0, %s153
      %s170 = sphi 0, %s154
    $region4: #{tpu_custom_call.1} parent=1 // loop_header_branch
      %26 = sbr.rel (%p24) target = $region8
    $region5: #{tpu_custom_call.1} parent=1 // loop_body
      %s28 = ssub.s32 %s23, 1
      %s29 = ssub.s32 %s23, 2
      %s39 = sadd.s32 1, %s32
      %p40 = scmp.ge.s32.totalorder %s39, 3
      %s41 = scalar_select %p40, 0, %s39
      %s42 = sadd.s32 1, %s31
      %s43 = scalar_select %p40, %s42, %s31
      %p44 = scmp.ge.s32.totalorder %s43, 4
      %s45 = scalar_select %p44, 0, %s43
      %s46 = sadd.s32 1, %s30
      %s47 = scalar_select %p44, %s46, %s30
      %p48 = scmp.ge.s32.totalorder %s47, 2
      %s49 = scalar_select %p48, 0, %s47
      %s50 = smul.u32 %s30, 4
      %s51 = sadd.s32 %s50, %s31
      %s52 = sld [smem:[#allocation5 + %s51]]
      %s53 = sld [smem:[#allocation4 + %s51]]
      %s54 = ssub.s32 %s52, 1
      %p55 = scmp.gt.s32.totalorder %s54, 0
      %s56 = scalar_select %p55, %s54, 0
      %p57 = scmp.lt.s32.totalorder %s32, %s56
      %s58 = scalar_select %p57, %s32, %s56
      %s59 = sadd.s32 %s53, %s58
      %s60 = smul.u32 %s49, 4
      %s61 = sadd.s32 %s60, %s45
      %s62 = sld [smem:[#allocation5 + %s61]]
      %s63 = sld [smem:[#allocation4 + %s61]]
      %s64 = ssub.s32 %s62, 1
      %p65 = scmp.gt.s32.totalorder %s64, 0
      %s66 = scalar_select %p65, %s64, 0
      %p67 = scmp.lt.s32.totalorder %s41, %s66
      %s68 = scalar_select %p67, %s41, %s66
      %s69 = sadd.s32 %s63, %s68
      %s70 = ssub.s32 %s30, %s49
      %s71 = ssub.s32 %s59, %s69
      %s72 = sor.u32 %s70, %s71
      %p73 = scmp.eq.s32.totalorder %s72, 0
      %s75 = sadd.s32 %s74, 1
      %s76 = scalar_select %p73, %s74, %s75
      %p79 = pneg %p73
      %p80 = scmp.eq.s32.totalorder %s23, 23
      %p81 = por %p79, %p80
      %p82 = scmp.ne.s32.totalorder %s74, %s77
      %p83 = scmp.eq.s32.totalorder %s23, 0
      %p84 = por %p82, %p83
      %p85 = scmp.ne.s32.totalorder %s74, %s77
      %p86 = scmp.eq.s32.totalorder %s28, 23
      %p87 = por %p85, %p86
      %p88 = scmp.ne.s32.totalorder %s77, %s78
      %p89 = scmp.eq.s32.totalorder %s28, 0
      %p90 = por %p88, %p89
      %p91 = scmp.ne.s32.totalorder %s77, %s78
      %p92 = scmp.eq.s32.totalorder %s29, 23
      %p93 = por %p91, %p92
      %p95 = scmp.ne.s32.totalorder %s78, %s94
      %p96 = scmp.eq.s32.totalorder %s29, 0
      %p97 = por %p95, %p96
      %s98 = smul.u32 %s30, 4
      %s99 = sadd.s32 %s98, %s31
      %s100 = sld [smem:[#allocation5 + %s99]]
      %s101 = sld [smem:[#allocation4 + %s99]]
      %s102 = ssub.s32 %s100, 1
      %p103 = scmp.gt.s32.totalorder %s102, 0
      %s104 = scalar_select %p103, %s102, 0
      %p105 = scmp.lt.s32.totalorder %s32, %s104
      %s106 = scalar_select %p105, %s32, %s104
      %s107 = sadd.s32 %s101, %s106
      %s108 = smul.u32 %s49, 4
      %s109 = sadd.s32 %s108, %s45
      %s110 = sld [smem:[#allocation5 + %s109]]
      %s111 = sld [smem:[#allocation4 + %s109]]
      %s112 = ssub.s32 %s110, 1
      %p113 = scmp.gt.s32.totalorder %s112, 0
      %s114 = scalar_select %p113, %s112, 0
      %p115 = scmp.lt.s32.totalorder %s41, %s114
      %s116 = scalar_select %p115, %s41, %s114
      %s117 = sadd.s32 %s111, %s116
      %s118 = ssub.s32 %s30, %s49
      %s119 = ssub.s32 %s107, %s117
      %s120 = sor.u32 %s118, %s119
      %p121 = scmp.eq.s32.totalorder %s120, 0
      %s123 = sadd.s32 %s122, 1
      %s124 = scalar_select %p121, %s122, %s123
      %p127 = pneg %p121
      %p128 = scmp.eq.s32.totalorder %s23, 23
      %p129 = por %p127, %p128
      %p130 = scmp.ne.s32.totalorder %s122, %s125
      %p131 = scmp.eq.s32.totalorder %s23, 0
      %p132 = por %p130, %p131
      %p133 = scmp.ne.s32.totalorder %s122, %s125
      %p134 = scmp.eq.s32.totalorder %s28, 23
      %p135 = por %p133, %p134
      %p136 = scmp.ne.s32.totalorder %s125, %s126
      %p137 = scmp.eq.s32.totalorder %s28, 0
      %p138 = por %p136, %p137
      %p139 = scmp.ne.s32.totalorder %s125, %s126
      %p140 = scmp.eq.s32.totalorder %s29, 23
      %p141 = por %p139, %p140
      %p143 = scmp.ne.s32.totalorder %s126, %s142
      %p144 = scmp.eq.s32.totalorder %s29, 0
      %p145 = por %p143, %p144
      %s146 = ssub.s32 %s30, %s49
      %s147 = ssub.s32 %s31, %s45
      %s148 = sor.u32 %s146, %s147
      %p149 = scmp.eq.s32.totalorder %s148, 0
      %s151 = sadd.s32 %s150, 1
      %s152 = scalar_select %p149, %s150, %s151
      %p155 = pneg %p149
      %p156 = scmp.eq.s32.totalorder %s23, 23
      %p157 = por %p155, %p156
      %p158 = scmp.ne.s32.totalorder %s150, %s153
      %p159 = scmp.eq.s32.totalorder %s23, 0
      %p160 = por %p158, %p159
      %p161 = scmp.ne.s32.totalorder %s150, %s153
      %p162 = scmp.eq.s32.totalorder %s28, 23
      %p163 = por %p161, %p162
      %p164 = scmp.ne.s32.totalorder %s153, %s154
      %p165 = scmp.eq.s32.totalorder %s28, 0
      %p166 = por %p164, %p165
      %p167 = scmp.ne.s32.totalorder %s153, %s154
      %p168 = scmp.eq.s32.totalorder %s29, 23
      %p169 = por %p167, %p168
      %p171 = scmp.ne.s32.totalorder %s154, %s170
      %p172 = scmp.eq.s32.totalorder %s29, 0
      %p173 = por %p171, %p172
      %p174 = scmp.le.s32.totalorder 1, %s23
      %p175 = scmp.lt.s32.totalorder %s23, 25
      %p176 = pnand %p174, %p175
      %p177 = pneg %p176
      // Predicated region
      $region9: #{tpu_custom_call.1} parent=5 // pred_check
        _
      $region10: #{tpu_custom_call.1} parent=5 // pred_check_branch
        %179 = sbr.rel (%p176) target = $region12
      $region11: #{tpu_custom_call.1} parent=5 // pred_region
        %s180 = ssub.s32 %s23, 1
      $region12: #{tpu_custom_call.1} parent=5 // pred_fallthru
        _
      %p181 = scmp.lt.s32.totalorder %s23, 24
      // Predicated region
      $region13: #{tpu_custom_call.1} parent=5 // pred_check
        %p182 = pneg %p181
      $region14: #{tpu_custom_call.1} parent=5 // pred_check_branch
        %184 = sbr.rel (%p182) target = $region16
      $region15: #{tpu_custom_call.1} parent=5 // pred_region
        // Predicated region
        $region17: #{tpu_custom_call.1} parent=15 // pred_check
          %p185 = pneg %p84
        $region18: #{tpu_custom_call.1} parent=15 // pred_check_branch
          %187 = sbr.rel (%p185) target = $region20
        $region19: #{tpu_custom_call.1} parent=15 // pred_region
          %s188 = smul.u32 %s30, 4
          %s189 = sadd.s32 %s188, %s31
          %s190 = sld [smem:[#allocation5 + %s189]]
          %s191 = sld [smem:[#allocation4 + %s189]]
          %s192 = ssub.s32 %s190, 1
          %p193 = scmp.gt.s32.totalorder %s192, 0
          %s194 = scalar_select %p193, %s192, 0
          %p195 = scmp.lt.s32.totalorder %s32, %s194
          %s196 = scalar_select %p195, %s32, %s194
          %s197 = sadd.s32 %s191, %s196
          %s198 = smul.u32 32, %s197
          %p199 = scmp.lt.s32.totalorder %s30, 1
          %s200 = scalar_select %p199, %s30, 1
          %p201 = scmp.lt.s32.totalorder %s198, 127
          %s202 = scalar_select %p201, %s198, 127
          %s203 = smul.addr %s200, 128
          %s204 = sadd.s32 %s202, %s203
          %s205 = smul.addr %s204, 8
          %s206 = scalar_lea.vmem %s2, %s205
          %s207 = smul.u32 %s30, 4
          %s208 = sadd.s32 %s207, %s31
          %s209 = sld [smem:[#allocation5 + %s208]]
          %s210 = sld [smem:[#allocation4 + %s208]]
          %s211 = ssub.s32 %s209, 1
          %p212 = scmp.gt.s32.totalorder %s211, 0
          %s213 = scalar_select %p212, %s211, 0
          %p214 = scmp.lt.s32.totalorder %s32, %s213
          %s215 = scalar_select %p214, %s32, %s213
          %s216 = sadd.s32 %s210, %s215
          %s217 = smul.u32 32, %s216
        $region20: #{tpu_custom_call.1} parent=15 // pred_fallthru
          _
        // Predicated region
        $region21: #{tpu_custom_call.1} parent=15 // pred_check
          %p218 = pneg %p132
        $region22: #{tpu_custom_call.1} parent=15 // pred_check_branch
          %220 = sbr.rel (%p218) target = $region24
        $region23: #{tpu_custom_call.1} parent=15 // pred_region
          %s221 = smul.u32 %s30, 4
          %s222 = sadd.s32 %s221, %s31
          %s223 = sld [smem:[#allocation5 + %s222]]
          %s224 = sld [smem:[#allocation4 + %s222]]
          %s225 = ssub.s32 %s223, 1
          %p226 = scmp.gt.s32.totalorder %s225, 0
          %s227 = scalar_select %p226, %s225, 0
          %p228 = scmp.lt.s32.totalorder %s32, %s227
          %s229 = scalar_select %p228, %s32, %s227
          %s230 = sadd.s32 %s224, %s229
          %s231 = smul.u32 32, %s230
          %p232 = scmp.lt.s32.totalorder %s30, 1
          %s233 = scalar_select %p232, %s30, 1
          %p234 = scmp.lt.s32.totalorder %s231, 127
          %s235 = scalar_select %p234, %s231, 127
          %s236 = smul.addr %s233, 128
          %s237 = sadd.s32 %s235, %s236
          %s238 = smul.addr %s237, 8
          %s239 = scalar_lea.vmem %s3, %s238
          %s240 = smul.u32 %s30, 4
          %s241 = sadd.s32 %s240, %s31
          %s242 = sld [smem:[#allocation5 + %s241]]
          %s243 = sld [smem:[#allocation4 + %s241]]
          %s244 = ssub.s32 %s242, 1
          %p245 = scmp.gt.s32.totalorder %s244, 0
          %s246 = scalar_select %p245, %s244, 0
          %p247 = scmp.lt.s32.totalorder %s32, %s246
          %s248 = scalar_select %p247, %s32, %s246
          %s249 = sadd.s32 %s243, %s248
          %s250 = smul.u32 32, %s249
        $region24: #{tpu_custom_call.1} parent=15 // pred_fallthru
          _
      $region16: #{tpu_custom_call.1} parent=5 // pred_fallthru
        _
      %p251 = scmp.le.s32.totalorder 1, %s23
      %p252 = scmp.lt.s32.totalorder %s23, 25
      %p253 = pnand %p251, %p252
      %p254 = pneg %p253
      // Predicated region
      $region25: #{tpu_custom_call.1} parent=5 // pred_check
        _
      $region26: #{tpu_custom_call.1} parent=5 // pred_check_branch
        %256 = sbr.rel (%p253) target = $region28
      $region27: #{tpu_custom_call.1} parent=5 // pred_region
        %s257 = ssub.s32 %s23, 1
        %s258 = smul.u32 %s33, 4
        %s259 = sadd.s32 %s258, %s34
        %s260 = sld [smem:[#allocation5 + %s259]]
        %s261 = sld [smem:[#allocation4 + %s259]]
        %s262 = ssub.s32 %s260, 1
        %p263 = scmp.gt.s32.totalorder %s262, 0
        %s264 = scalar_select %p263, %s262, 0
        %p265 = scmp.lt.s32.totalorder %s35, %s264
        %s266 = scalar_select %p265, %s35, %s264
        %s267 = sadd.s32 %s261, %s266
        %s268 = smul.u32 32, %s267
        %p269 = scmp.lt.s32.totalorder %s33, 1
        %s270 = scalar_select %p269, %s33, 1
        %p271 = scmp.lt.s32.totalorder %s268, 127
        %s272 = scalar_select %p271, %s268, 127
        %s273 = smul.addr %s270, 128
        %s274 = sadd.s32 %s272, %s273
        %s275 = smul.addr %s274, 8
        %s276 = scalar_lea.vmem %s2, %s275
        %p277 = pneg %p90
        %p278 = pneg %p87
        %s279 = smul.u32 %s33, 4
        %s280 = sadd.s32 %s279, %s34
        %s281 = sld [smem:[#allocation5 + %s280]]
        %s282 = sld [smem:[#allocation4 + %s280]]
        %s283 = ssub.s32 %s281, 1
        %p284 = scmp.gt.s32.totalorder %s283, 0
        %s285 = scalar_select %p284, %s283, 0
        %p286 = scmp.lt.s32.totalorder %s35, %s285
        %s287 = scalar_select %p286, %s35, %s285
        %s288 = sadd.s32 %s282, %s287
        %s289 = smul.u32 32, %s288
        %p290 = scmp.lt.s32.totalorder %s33, 1
        %s291 = scalar_select %p290, %s33, 1
        %p292 = scmp.lt.s32.totalorder %s289, 127
        %s293 = scalar_select %p292, %s289, 127
        %s294 = smul.addr %s291, 128
        %s295 = sadd.s32 %s293, %s294
        %s296 = smul.addr %s295, 8
        %s297 = scalar_lea.vmem %s3, %s296
        %p298 = pneg %p138
        %p299 = pneg %p135
        %p300 = pneg %p166
        %p301 = pneg %p163
        %s302 = sand.u32 %s153, 1
        %s303 = scalar_lea.sflag [#allocation7], %s302
        %s304 = sand.u32 %s153, 1
        %s305 = smul.addr %s304, 16
        %s306 = scalar_lea.vmem [#allocation6], %s305
        %s307 = smul.u32 %s33, 4
        %s308 = sadd.s32 %s307, %s34
        %s309 = sld [smem:[#allocation5 + %s308]]
        %s310 = sld [smem:[#allocation4 + %s308]]
        %s311 = ssub.s32 %s309, 1
        %p312 = scmp.gt.s32.totalorder %s311, 0
        %s313 = scalar_select %p312, %s311, 0
        %p314 = scmp.lt.s32.totalorder %s35, %s313
        %s315 = scalar_select %p314, %s35, %s313
        %s316 = sadd.s32 %s310, %s315
        %s317 = smul.u32 32, %s316
        %p318 = scmp.lt.s32.totalorder %s33, 1
        %s319 = scalar_select %p318, %s33, 1
        %p320 = scmp.lt.s32.totalorder %s317, 127
        %s321 = scalar_select %p320, %s317, 127
        %s322 = smul.addr %s319, 128
        %s323 = sadd.s32 %s321, %s322
        %s324 = smul.addr %s323, 8
        %s325 = scalar_lea.vmem %s2, %s324
        %s326 = smul.u32 %s33, 4
        %s327 = sadd.s32 %s326, %s34
        %s328 = sld [smem:[#allocation5 + %s327]]
        %s329 = sld [smem:[#allocation4 + %s327]]
        %s330 = ssub.s32 %s328, 1
        %p331 = scmp.gt.s32.totalorder %s330, 0
        %s332 = scalar_select %p331, %s330, 0
        %p333 = scmp.lt.s32.totalorder %s35, %s332
        %s334 = scalar_select %p333, %s35, %s332
        %s335 = sadd.s32 %s329, %s334
        %s336 = smul.u32 32, %s335
        %s337 = smul.u32 %s33, 4
        %s338 = sadd.s32 %s337, %s34
        %s339 = sld [smem:[#allocation5 + %s338]]
        %s340 = sld [smem:[#allocation4 + %s338]]
        %s341 = ssub.s32 %s339, 1
        %p342 = scmp.gt.s32.totalorder %s341, 0
        %s343 = scalar_select %p342, %s341, 0
        %p344 = scmp.lt.s32.totalorder %s35, %s343
        %s345 = scalar_select %p344, %s35, %s343
        %s346 = sadd.s32 %s340, %s345
        %s347 = smul.u32 32, %s346
        %p348 = scmp.lt.s32.totalorder %s33, 1
        %s349 = scalar_select %p348, %s33, 1
        %p350 = scmp.lt.s32.totalorder %s347, 127
        %s351 = scalar_select %p350, %s347, 127
        %s352 = smul.addr %s349, 128
        %s353 = sadd.s32 %s351, %s352
        %s354 = smul.addr %s353, 8
        %s355 = scalar_lea.vmem %s3, %s354
        %s356 = smul.u32 %s33, 4
        %s357 = sadd.s32 %s356, %s34
        %s358 = sld [smem:[#allocation5 + %s357]]
        %s359 = sld [smem:[#allocation4 + %s357]]
        %s360 = ssub.s32 %s358, 1
        %p361 = scmp.gt.s32.totalorder %s360, 0
        %s362 = scalar_select %p361, %s360, 0
        %p363 = scmp.lt.s32.totalorder %s35, %s362
        %s364 = scalar_select %p363, %s35, %s362
        %s365 = sadd.s32 %s359, %s364
        %s366 = smul.u32 32, %s365
        %s367 = smul.u32 4, %s34
        %s368 = smul.u32 %s33, 4
        %s369 = sadd.s32 %s368, %s34
        %s370 = sld [smem:[#allocation5 + %s369]]
        %p371 = scmp.eq.s32.totalorder %s35, 0
        // Predicated region
        $region29: #{tpu_custom_call.1} parent=27 // pred_check
          %p372 = pneg %p371
        $region30: #{tpu_custom_call.1} parent=27 // pred_check_branch
          %374 = sbr.rel (%p372) target = $region32
        $region31: #{tpu_custom_call.1} parent=27 // pred_region
          %375 = vst [vmem:[#allocation2] sm:$0xff] 0.0
          %376 = vst [vmem:[#allocation2 + $0x8] sm:$0xff] 0.0
        $region32: #{tpu_custom_call.1} parent=27 // pred_fallthru
          _
        %p377 = scmp.lt.s32.totalorder %s35, %s370
        // Predicated region
        $region33: #{tpu_custom_call.1} parent=27 // pred_check
          %p378 = pneg %p377
        $region34: #{tpu_custom_call.1} parent=27 // pred_check_branch
          %380 = sbr.rel (%p378) target = $region36
        $region35: #{tpu_custom_call.1} parent=27 // pred_region
          %s381 = smul.u32 %s34, 512
          %v382 = vlaneseq
          %v383 = vand.u32 %v382, 127
          %v384 = vadd.s32 %v383, 128
          %v385 = vadd.s32 %v383, 256
          %v386 = vadd.s32 %v383, 384
          %v387 = vstv %s381
          %v388 = vadd.s32 %v387, %v383
          %v389 = vadd.s32 %v387, %v384
          %v390 = vadd.s32 %v387, %v385
          %v391 = vadd.s32 %v387, %v386
          %v392 = vld [vmem:[%s325] sm:$0xff]
          %v393 = vld [vmem:[%s325 + $0x8] sm:$0xff]
          %v394 = vld [vmem:[%s325 + $0x10] sm:$0xff]
          %v395 = vld [vmem:[%s325 + $0x18] sm:$0xff]
          %v396 = vld [vmem:[%s325 + $0x20] sm:$0xff]
          %v397 = vld [vmem:[%s325 + $0x28] sm:$0xff]
          %v398 = vld [vmem:[%s325 + $0x30] sm:$0xff]
          %v399 = vld [vmem:[%s325 + $0x38] sm:$0xff]
          %400 = vset.pattern.permute.xlu0 0
          %401 = vperm.xlu0 %400, %v392
          %v402 = vpop.permute.xlu0 %401
          %403 = vset.pattern.permute.xlu0 0
          %404 = vperm.xlu0 %403, %v393
          %v405 = vpop.permute.xlu0 %404
          %406 = vset.pattern.permute.xlu0 0
          %407 = vperm.xlu0 %406, %v394
          %v408 = vpop.permute.xlu0 %407
          %409 = vset.pattern.permute.xlu0 0
          %410 = vperm.xlu0 %409, %v395
          %v411 = vpop.permute.xlu0 %410
          %412 = vset.pattern.permute.xlu0 0
          %413 = vperm.xlu0 %412, %v396
          %v414 = vpop.permute.xlu0 %413
          %415 = vset.pattern.permute.xlu0 0
          %416 = vperm.xlu0 %415, %v397
          %v417 = vpop.permute.xlu0 %416
          %418 = vset.pattern.permute.xlu0 0
          %419 = vperm.xlu0 %418, %v398
          %v420 = vpop.permute.xlu0 %419
          %421 = vset.pattern.permute.xlu0 0
          %422 = vperm.xlu0 %421, %v399
          %v423 = vpop.permute.xlu0 %422
          %vm424 = vcmp.eq.s32.totalorder %v402, %v388
          %vm425 = vcmp.eq.s32.totalorder %v402, %v389
          %vm426 = vcmp.eq.s32.totalorder %v402, %v390
          %vm427 = vcmp.eq.s32.totalorder %v402, %v391
          %vm428 = vcmp.eq.s32.totalorder %v405, %v388
          %vm429 = vcmp.eq.s32.totalorder %v405, %v389
          %vm430 = vcmp.eq.s32.totalorder %v405, %v390
          %vm431 = vcmp.eq.s32.totalorder %v405, %v391
          %vm432 = vcmp.eq.s32.totalorder %v408, %v388
          %vm433 = vcmp.eq.s32.totalorder %v408, %v389
          %vm434 = vcmp.eq.s32.totalorder %v408, %v390
          %vm435 = vcmp.eq.s32.totalorder %v408, %v391
          %vm436 = vcmp.eq.s32.totalorder %v411, %v388
          %vm437 = vcmp.eq.s32.totalorder %v411, %v389
          %vm438 = vcmp.eq.s32.totalorder %v411, %v390
          %vm439 = vcmp.eq.s32.totalorder %v411, %v391
          %vm440 = vcmp.eq.s32.totalorder %v414, %v388
          %vm441 = vcmp.eq.s32.totalorder %v414, %v389
          %vm442 = vcmp.eq.s32.totalorder %v414, %v390
          %vm443 = vcmp.eq.s32.totalorder %v414, %v391
          %vm444 = vcmp.eq.s32.totalorder %v417, %v388
          %vm445 = vcmp.eq.s32.totalorder %v417, %v389
          %vm446 = vcmp.eq.s32.totalorder %v417, %v390
          %vm447 = vcmp.eq.s32.totalorder %v417, %v391
          %vm448 = vcmp.eq.s32.totalorder %v420, %v388
          %vm449 = vcmp.eq.s32.totalorder %v420, %v389
          %vm450 = vcmp.eq.s32.totalorder %v420, %v390
          %vm451 = vcmp.eq.s32.totalorder %v420, %v391
          %vm452 = vcmp.eq.s32.totalorder %v423, %v388
          %vm453 = vcmp.eq.s32.totalorder %v423, %v389
          %vm454 = vcmp.eq.s32.totalorder %v423, %v390
          %vm455 = vcmp.eq.s32.totalorder %v423, %v391
          %v456 = vld [vmem:[%s355] sm:$0xff]
          %v457 = vld [vmem:[%s355 + $0x8] sm:$0xff]
          %v458 = vld [vmem:[%s355 + $0x10] sm:$0xff]
          %v459 = vld [vmem:[%s355 + $0x18] sm:$0xff]
          %v460 = vld [vmem:[%s355 + $0x20] sm:$0xff]
          %v461 = vld [vmem:[%s355 + $0x28] sm:$0xff]
          %v462 = vld [vmem:[%s355 + $0x30] sm:$0xff]
          %v463 = vld [vmem:[%s355 + $0x38] sm:$0xff]
          %465 = vset.pattern.permute.xlu0 0
          %466 = vperm.xlu0 %465, %v456
          %v467 = vpop.permute.xlu0 %466
          %470 = vset.pattern.permute.xlu0 0
          %471 = vperm.xlu0 %470, %v457
          %v472 = vpop.permute.xlu0 %471
          %475 = vset.pattern.permute.xlu0 0
          %476 = vperm.xlu0 %475, %v458
          %v477 = vpop.permute.xlu0 %476
          %480 = vset.pattern.permute.xlu0 0
          %481 = vperm.xlu0 %480, %v459
          %v482 = vpop.permute.xlu0 %481
          %485 = vset.pattern.permute.xlu0 0
          %486 = vperm.xlu0 %485, %v460
          %v487 = vpop.permute.xlu0 %486
          %490 = vset.pattern.permute.xlu0 0
          %491 = vperm.xlu0 %490, %v461
          %v492 = vpop.permute.xlu0 %491
          %495 = vset.pattern.permute.xlu0 0
          %496 = vperm.xlu0 %495, %v462
          %v497 = vpop.permute.xlu0 %496
          %500 = vset.pattern.permute.xlu0 0
          %501 = vperm.xlu0 %500, %v463
          %v502 = vpop.permute.xlu0 %501
          %v504 = vsel %vm424, %v467, 0.0
          %v505 = vsel %vm425, %v467, 0.0
          %v506 = vsel %vm426, %v467, 0.0
          %v507 = vsel %vm427, %v467, 0.0
          %v508 = vsel %vm428, %v472, 0.0
          %v509 = vsel %vm429, %v472, 0.0
          %v510 = vsel %vm430, %v472, 0.0
          %v511 = vsel %vm431, %v472, 0.0
          %v512 = vsel %vm432, %v477, 0.0
          %v513 = vsel %vm433, %v477, 0.0
          %v514 = vsel %vm434, %v477, 0.0
          %v515 = vsel %vm435, %v477, 0.0
          %v516 = vsel %vm436, %v482, 0.0
          %v517 = vsel %vm437, %v482, 0.0
          %v518 = vsel %vm438, %v482, 0.0
          %v519 = vsel %vm439, %v482, 0.0
          %v520 = vsel %vm440, %v487, 0.0
          %v521 = vsel %vm441, %v487, 0.0
          %v522 = vsel %vm442, %v487, 0.0
          %v523 = vsel %vm443, %v487, 0.0
          %v524 = vsel %vm444, %v492, 0.0
          %v525 = vsel %vm445, %v492, 0.0
          %v526 = vsel %vm446, %v492, 0.0
          %v527 = vsel %vm447, %v492, 0.0
          %v528 = vsel %vm448, %v497, 0.0
          %v529 = vsel %vm449, %v497, 0.0
          %v530 = vsel %vm450, %v497, 0.0
          %v531 = vsel %vm451, %v497, 0.0
          %v532 = vsel %vm452, %v502, 0.0
          %v533 = vsel %vm453, %v502, 0.0
          %v534 = vsel %vm454, %v502, 0.0
          %v535 = vsel %vm455, %v502, 0.0
          %v536 = vmax.f32 %v504, %v508
          %v537 = vmax.f32 %v536, %v512
          %v538 = vmax.f32 %v537, %v516
          %v539 = vmax.f32 %v538, %v520
          %v540 = vmax.f32 %v539, %v524
          %v541 = vmax.f32 %v540, %v528
          %v542 = vmax.f32 %v541, %v532
          %v543 = vrot.slane %v542, 4
          %v544 = vmax.f32 %v542, %v543
          %v545 = vrot.slane %v544, 2
          %v546 = vmax.f32 %v544, %v545
          %v547 = vrot.slane %v546, 1
          %v548 = vmax.f32 %v546, %v547
          %v549 = vmax.f32 %v505, %v509
          %v550 = vmax.f32 %v549, %v513
          %v551 = vmax.f32 %v550, %v517
          %v552 = vmax.f32 %v551, %v521
          %v553 = vmax.f32 %v552, %v525
          %v554 = vmax.f32 %v553, %v529
          %v555 = vmax.f32 %v554, %v533
          %v556 = vrot.slane %v555, 4
          %v557 = vmax.f32 %v555, %v556
          %v558 = vrot.slane %v557, 2
          %v559 = vmax.f32 %v557, %v558
          %v560 = vrot.slane %v559, 1
          %v561 = vmax.f32 %v559, %v560
          %v562 = vmax.f32 %v506, %v510
          %v563 = vmax.f32 %v562, %v514
          %v564 = vmax.f32 %v563, %v518
          %v565 = vmax.f32 %v564, %v522
          %v566 = vmax.f32 %v565, %v526
          %v567 = vmax.f32 %v566, %v530
          %v568 = vmax.f32 %v567, %v534
          %v569 = vrot.slane %v568, 4
          %v570 = vmax.f32 %v568, %v569
          %v571 = vrot.slane %v570, 2
          %v572 = vmax.f32 %v570, %v571
          %v573 = vrot.slane %v572, 1
          %v574 = vmax.f32 %v572, %v573
          %v575 = vmax.f32 %v507, %v511
          %v576 = vmax.f32 %v575, %v515
          %v577 = vmax.f32 %v576, %v519
          %v578 = vmax.f32 %v577, %v523
          %v579 = vmax.f32 %v578, %v527
          %v580 = vmax.f32 %v579, %v531
          %v581 = vmax.f32 %v580, %v535
          %v582 = vrot.slane %v581, 4
          %v583 = vmax.f32 %v581, %v582
          %v584 = vrot.slane %v583, 2
          %v585 = vmax.f32 %v583, %v584
          %v586 = vrot.slane %v585, 1
          %v587 = vmax.f32 %v585, %v586
          %v588 = vmax.f32 %v548, 0.0
          %v589 = vmax.f32 %v561, 0.0
          %v590 = vmax.f32 %v574, 0.0
          %v591 = vmax.f32 %v587, 0.0
          %592 = vset.pattern.permute.xlu0 1
          %593 = vperm.xlu0 %592, %v456
          %v594 = vpop.permute.xlu0 %593
          %596 = vset.pattern.permute.xlu0 1
          %597 = vperm.xlu0 %596, %v457
          %v598 = vpop.permute.xlu0 %597
          %600 = vset.pattern.permute.xlu0 1
          %601 = vperm.xlu0 %600, %v458
          %v602 = vpop.permute.xlu0 %601
          %604 = vset.pattern.permute.xlu0 1
          %605 = vperm.xlu0 %604, %v459
          %v606 = vpop.permute.xlu0 %605
          %608 = vset.pattern.permute.xlu0 1
          %609 = vperm.xlu0 %608, %v460
          %v610 = vpop.permute.xlu0 %609
          %612 = vset.pattern.permute.xlu0 1
          %613 = vperm.xlu0 %612, %v461
          %v614 = vpop.permute.xlu0 %613
          %616 = vset.pattern.permute.xlu0 1
          %617 = vperm.xlu0 %616, %v462
          %v618 = vpop.permute.xlu0 %617
          %620 = vset.pattern.permute.xlu0 1
          %621 = vperm.xlu0 %620, %v463
          %v622 = vpop.permute.xlu0 %621
          %v624 = vsel %vm424, %v594, 0.0
          %v625 = vsel %vm425, %v594, 0.0
          %v626 = vsel %vm426, %v594, 0.0
          %v627 = vsel %vm427, %v594, 0.0
          %v628 = vsel %vm428, %v598, 0.0
          %v629 = vsel %vm429, %v598, 0.0
          %v630 = vsel %vm430, %v598, 0.0
          %v631 = vsel %vm431, %v598, 0.0
          %v632 = vsel %vm432, %v602, 0.0
          %v633 = vsel %vm433, %v602, 0.0
          %v634 = vsel %vm434, %v602, 0.0
          %v635 = vsel %vm435, %v602, 0.0
          %v636 = vsel %vm436, %v606, 0.0
          %v637 = vsel %vm437, %v606, 0.0
          %v638 = vsel %vm438, %v606, 0.0
          %v639 = vsel %vm439, %v606, 0.0
          %v640 = vsel %vm440, %v610, 0.0
          %v641 = vsel %vm441, %v610, 0.0
          %v642 = vsel %vm442, %v610, 0.0
          %v643 = vsel %vm443, %v610, 0.0
          %v644 = vsel %vm444, %v614, 0.0
          %v645 = vsel %vm445, %v614, 0.0
          %v646 = vsel %vm446, %v614, 0.0
          %v647 = vsel %vm447, %v614, 0.0
          %v648 = vsel %vm448, %v618, 0.0
          %v649 = vsel %vm449, %v618, 0.0
          %v650 = vsel %vm450, %v618, 0.0
          %v651 = vsel %vm451, %v618, 0.0
          %v652 = vsel %vm452, %v622, 0.0
          %v653 = vsel %vm453, %v622, 0.0
          %v654 = vsel %vm454, %v622, 0.0
          %v655 = vsel %vm455, %v622, 0.0
          %v656 = vmax.f32 %v624, %v628
          %v657 = vmax.f32 %v656, %v632
          %v658 = vmax.f32 %v657, %v636
          %v659 = vmax.f32 %v658, %v640
          %v660 = vmax.f32 %v659, %v644
          %v661 = vmax.f32 %v660, %v648
          %v662 = vmax.f32 %v661, %v652
          %v663 = vrot.slane %v662, 4
          %v664 = vmax.f32 %v662, %v663
          %v665 = vrot.slane %v664, 2
          %v666 = vmax.f32 %v664, %v665
          %v667 = vrot.slane %v666, 1
          %v668 = vmax.f32 %v666, %v667
          %v669 = vmax.f32 %v625, %v629
          %v670 = vmax.f32 %v669, %v633
          %v671 = vmax.f32 %v670, %v637
          %v672 = vmax.f32 %v671, %v641
          %v673 = vmax.f32 %v672, %v645
          %v674 = vmax.f32 %v673, %v649
          %v675 = vmax.f32 %v674, %v653
          %v676 = vrot.slane %v675, 4
          %v677 = vmax.f32 %v675, %v676
          %v678 = vrot.slane %v677, 2
          %v679 = vmax.f32 %v677, %v678
          %v680 = vrot.slane %v679, 1
          %v681 = vmax.f32 %v679, %v680
          %v682 = vmax.f32 %v626, %v630
          %v683 = vmax.f32 %v682, %v634
          %v684 = vmax.f32 %v683, %v638
          %v685 = vmax.f32 %v684, %v642
          %v686 = vmax.f32 %v685, %v646
          %v687 = vmax.f32 %v686, %v650
          %v688 = vmax.f32 %v687, %v654
          %v689 = vrot.slane %v688, 4
          %v690 = vmax.f32 %v688, %v689
          %v691 = vrot.slane %v690, 2
          %v692 = vmax.f32 %v690, %v691
          %v693 = vrot.slane %v692, 1
          %v694 = vmax.f32 %v692, %v693
          %v695 = vmax.f32 %v627, %v631
          %v696 = vmax.f32 %v695, %v635
          %v697 = vmax.f32 %v696, %v639
          %v698 = vmax.f32 %v697, %v643
          %v699 = vmax.f32 %v698, %v647
          %v700 = vmax.f32 %v699, %v651
          %v701 = vmax.f32 %v700, %v655
          %v702 = vrot.slane %v701, 4
          %v703 = vmax.f32 %v701, %v702
          %v704 = vrot.slane %v703, 2
          %v705 = vmax.f32 %v703, %v704
          %v706 = vrot.slane %v705, 1
          %v707 = vmax.f32 %v705, %v706
          %v708 = vmax.f32 %v668, 0.0
          %v709 = vmax.f32 %v681, 0.0
          %v710 = vmax.f32 %v694, 0.0
          %v711 = vmax.f32 %v707, 0.0
          %712 = vset.pattern.permute.xlu0 2
          %713 = vperm.xlu0 %712, %v456
          %v714 = vpop.permute.xlu0 %713
          %716 = vset.pattern.permute.xlu0 2
          %717 = vperm.xlu0 %716, %v457
          %v718 = vpop.permute.xlu0 %717
          %720 = vset.pattern.permute.xlu0 2
          %721 = vperm.xlu0 %720, %v458
          %v722 = vpop.permute.xlu0 %721
          %724 = vset.pattern.permute.xlu0 2
          %725 = vperm.xlu0 %724, %v459
          %v726 = vpop.permute.xlu0 %725
          %728 = vset.pattern.permute.xlu0 2
          %729 = vperm.xlu0 %728, %v460
          %v730 = vpop.permute.xlu0 %729
          %732 = vset.pattern.permute.xlu0 2
          %733 = vperm.xlu0 %732, %v461
          %v734 = vpop.permute.xlu0 %733
          %736 = vset.pattern.permute.xlu0 2
          %737 = vperm.xlu0 %736, %v462
          %v738 = vpop.permute.xlu0 %737
          %740 = vset.pattern.permute.xlu0 2
          %741 = vperm.xlu0 %740, %v463
          %v742 = vpop.permute.xlu0 %741
          %v744 = vsel %vm424, %v714, 0.0
          %v745 = vsel %vm425, %v714, 0.0
          %v746 = vsel %vm426, %v714, 0.0
          %v747 = vsel %vm427, %v714, 0.0
          %v748 = vsel %vm428, %v718, 0.0
          %v749 = vsel %vm429, %v718, 0.0
          %v750 = vsel %vm430, %v718, 0.0
          %v751 = vsel %vm431, %v718, 0.0
          %v752 = vsel %vm432, %v722, 0.0
          %v753 = vsel %vm433, %v722, 0.0
          %v754 = vsel %vm434, %v722, 0.0
          %v755 = vsel %vm435, %v722, 0.0
          %v756 = vsel %vm436, %v726, 0.0
          %v757 = vsel %vm437, %v726, 0.0
          %v758 = vsel %vm438, %v726, 0.0
          %v759 = vsel %vm439, %v726, 0.0
          %v760 = vsel %vm440, %v730, 0.0
          %v761 = vsel %vm441, %v730, 0.0
          %v762 = vsel %vm442, %v730, 0.0
          %v763 = vsel %vm443, %v730, 0.0
          %v764 = vsel %vm444, %v734, 0.0
          %v765 = vsel %vm445, %v734, 0.0
          %v766 = vsel %vm446, %v734, 0.0
          %v767 = vsel %vm447, %v734, 0.0
          %v768 = vsel %vm448, %v738, 0.0
          %v769 = vsel %vm449, %v738, 0.0
          %v770 = vsel %vm450, %v738, 0.0
          %v771 = vsel %vm451, %v738, 0.0
          %v772 = vsel %vm452, %v742, 0.0
          %v773 = vsel %vm453, %v742, 0.0
          %v774 = vsel %vm454, %v742, 0.0
          %v775 = vsel %vm455, %v742, 0.0
          %v776 = vmax.f32 %v744, %v748
          %v777 = vmax.f32 %v776, %v752
          %v778 = vmax.f32 %v777, %v756
          %v779 = vmax.f32 %v778, %v760
          %v780 = vmax.f32 %v779, %v764
          %v781 = vmax.f32 %v780, %v768
          %v782 = vmax.f32 %v781, %v772
          %v783 = vrot.slane %v782, 4
          %v784 = vmax.f32 %v782, %v783
          %v785 = vrot.slane %v784, 2
          %v786 = vmax.f32 %v784, %v785
          %v787 = vrot.slane %v786, 1
          %v788 = vmax.f32 %v786, %v787
          %v789 = vmax.f32 %v745, %v749
          %v790 = vmax.f32 %v789, %v753
          %v791 = vmax.f32 %v790, %v757
          %v792 = vmax.f32 %v791, %v761
          %v793 = vmax.f32 %v792, %v765
          %v794 = vmax.f32 %v793, %v769
          %v795 = vmax.f32 %v794, %v773
          %v796 = vrot.slane %v795, 4
          %v797 = vmax.f32 %v795, %v796
          %v798 = vrot.slane %v797, 2
          %v799 = vmax.f32 %v797, %v798
          %v800 = vrot.slane %v799, 1
          %v801 = vmax.f32 %v799, %v800
          %v802 = vmax.f32 %v746, %v750
          %v803 = vmax.f32 %v802, %v754
          %v804 = vmax.f32 %v803, %v758
          %v805 = vmax.f32 %v804, %v762
          %v806 = vmax.f32 %v805, %v766
          %v807 = vmax.f32 %v806, %v770
          %v808 = vmax.f32 %v807, %v774
          %v809 = vrot.slane %v808, 4
          %v810 = vmax.f32 %v808, %v809
          %v811 = vrot.slane %v810, 2
          %v812 = vmax.f32 %v810, %v811
          %v813 = vrot.slane %v812, 1
          %v814 = vmax.f32 %v812, %v813
          %v815 = vmax.f32 %v747, %v751
          %v816 = vmax.f32 %v815, %v755
          %v817 = vmax.f32 %v816, %v759
          %v818 = vmax.f32 %v817, %v763
          %v819 = vmax.f32 %v818, %v767
          %v820 = vmax.f32 %v819, %v771
          %v821 = vmax.f32 %v820, %v775
          %v822 = vrot.slane %v821, 4
          %v823 = vmax.f32 %v821, %v822
          %v824 = vrot.slane %v823, 2
          %v825 = vmax.f32 %v823, %v824
          %v826 = vrot.slane %v825, 1
          %v827 = vmax.f32 %v825, %v826
          %v828 = vmax.f32 %v788, 0.0
          %v829 = vmax.f32 %v801, 0.0
          %v830 = vmax.f32 %v814, 0.0
          %v831 = vmax.f32 %v827, 0.0
          %832 = vset.pattern.permute.xlu0 3
          %833 = vperm.xlu0 %832, %v456
          %v834 = vpop.permute.xlu0 %833
          %836 = vset.pattern.permute.xlu0 3
          %837 = vperm.xlu0 %836, %v457
          %v838 = vpop.permute.xlu0 %837
          %840 = vset.pattern.permute.xlu0 3
          %841 = vperm.xlu0 %840, %v458
          %v842 = vpop.permute.xlu0 %841
          %844 = vset.pattern.permute.xlu0 3
          %845 = vperm.xlu0 %844, %v459
          %v846 = vpop.permute.xlu0 %845
          %848 = vset.pattern.permute.xlu0 3
          %849 = vperm.xlu0 %848, %v460
          %v850 = vpop.permute.xlu0 %849
          %852 = vset.pattern.permute.xlu0 3
          %853 = vperm.xlu0 %852, %v461
          %v854 = vpop.permute.xlu0 %853
          %856 = vset.pattern.permute.xlu0 3
          %857 = vperm.xlu0 %856, %v462
          %v858 = vpop.permute.xlu0 %857
          %860 = vset.pattern.permute.xlu0 3
          %861 = vperm.xlu0 %860, %v463
          %v862 = vpop.permute.xlu0 %861
          %v864 = vsel %vm424, %v834, 0.0
          %v865 = vsel %vm425, %v834, 0.0
          %v866 = vsel %vm426, %v834, 0.0
          %v867 = vsel %vm427, %v834, 0.0
          %v868 = vsel %vm428, %v838, 0.0
          %v869 = vsel %vm429, %v838, 0.0
          %v870 = vsel %vm430, %v838, 0.0
          %v871 = vsel %vm431, %v838, 0.0
          %v872 = vsel %vm432, %v842, 0.0
          %v873 = vsel %vm433, %v842, 0.0
          %v874 = vsel %vm434, %v842, 0.0
          %v875 = vsel %vm435, %v842, 0.0
          %v876 = vsel %vm436, %v846, 0.0
          %v877 = vsel %vm437, %v846, 0.0
          %v878 = vsel %vm438, %v846, 0.0
          %v879 = vsel %vm439, %v846, 0.0
          %v880 = vsel %vm440, %v850, 0.0
          %v881 = vsel %vm441, %v850, 0.0
          %v882 = vsel %vm442, %v850, 0.0
          %v883 = vsel %vm443, %v850, 0.0
          %v884 = vsel %vm444, %v854, 0.0
          %v885 = vsel %vm445, %v854, 0.0
          %v886 = vsel %vm446, %v854, 0.0
          %v887 = vsel %vm447, %v854, 0.0
          %v888 = vsel %vm448, %v858, 0.0
          %v889 = vsel %vm449, %v858, 0.0
          %v890 = vsel %vm450, %v858, 0.0
          %v891 = vsel %vm451, %v858, 0.0
          %v892 = vsel %vm452, %v862, 0.0
          %v893 = vsel %vm453, %v862, 0.0
          %v894 = vsel %vm454, %v862, 0.0
          %v895 = vsel %vm455, %v862, 0.0
          %v896 = vmax.f32 %v864, %v868
          %v897 = vmax.f32 %v896, %v872
          %v898 = vmax.f32 %v897, %v876
          %v899 = vmax.f32 %v898, %v880
          %v900 = vmax.f32 %v899, %v884
          %v901 = vmax.f32 %v900, %v888
          %v902 = vmax.f32 %v901, %v892
          %v903 = vrot.slane %v902, 4
          %v904 = vmax.f32 %v902, %v903
          %v905 = vrot.slane %v904, 2
          %v906 = vmax.f32 %v904, %v905
          %v907 = vrot.slane %v906, 1
          %v908 = vmax.f32 %v906, %v907
          %v909 = vmax.f32 %v865, %v869
          %v910 = vmax.f32 %v909, %v873
          %v911 = vmax.f32 %v910, %v877
          %v912 = vmax.f32 %v911, %v881
          %v913 = vmax.f32 %v912, %v885
          %v914 = vmax.f32 %v913, %v889
          %v915 = vmax.f32 %v914, %v893
          %v916 = vrot.slane %v915, 4
          %v917 = vmax.f32 %v915, %v916
          %v918 = vrot.slane %v917, 2
          %v919 = vmax.f32 %v917, %v918
          %v920 = vrot.slane %v919, 1
          %v921 = vmax.f32 %v919, %v920
          %v922 = vmax.f32 %v866, %v870
          %v923 = vmax.f32 %v922, %v874
          %v924 = vmax.f32 %v923, %v878
          %v925 = vmax.f32 %v924, %v882
          %v926 = vmax.f32 %v925, %v886
          %v927 = vmax.f32 %v926, %v890
          %v928 = vmax.f32 %v927, %v894
          %v929 = vrot.slane %v928, 4
          %v930 = vmax.f32 %v928, %v929
          %v931 = vrot.slane %v930, 2
          %v932 = vmax.f32 %v930, %v931
          %v933 = vrot.slane %v932, 1
          %v934 = vmax.f32 %v932, %v933
          %v935 = vmax.f32 %v867, %v871
          %v936 = vmax.f32 %v935, %v875
          %v937 = vmax.f32 %v936, %v879
          %v938 = vmax.f32 %v937, %v883
          %v939 = vmax.f32 %v938, %v887
          %v940 = vmax.f32 %v939, %v891
          %v941 = vmax.f32 %v940, %v895
          %v942 = vrot.slane %v941, 4
          %v943 = vmax.f32 %v941, %v942
          %v944 = vrot.slane %v943, 2
          %v945 = vmax.f32 %v943, %v944
          %v946 = vrot.slane %v945, 1
          %v947 = vmax.f32 %v945, %v946
          %v948 = vmax.f32 %v908, 0.0
          %v949 = vmax.f32 %v921, 0.0
          %v950 = vmax.f32 %v934, 0.0
          %v951 = vmax.f32 %v947, 0.0
          %v952 = vld [vmem:[%s325 + $0x40] sm:$0xff]
          %v953 = vld [vmem:[%s325 + $0x48] sm:$0xff]
          %v954 = vld [vmem:[%s325 + $0x50] sm:$0xff]
          %v955 = vld [vmem:[%s325 + $0x58] sm:$0xff]
          %v956 = vld [vmem:[%s325 + $0x60] sm:$0xff]
          %v957 = vld [vmem:[%s325 + $0x68] sm:$0xff]
          %v958 = vld [vmem:[%s325 + $0x70] sm:$0xff]
          %v959 = vld [vmem:[%s325 + $0x78] sm:$0xff]
          %960 = vset.pattern.permute.xlu0 0
          %961 = vperm.xlu0 %960, %v952
          %v962 = vpop.permute.xlu0 %961
          %963 = vset.pattern.permute.xlu0 0
          %964 = vperm.xlu0 %963, %v953
          %v965 = vpop.permute.xlu0 %964
          %966 = vset.pattern.permute.xlu0 0
          %967 = vperm.xlu0 %966, %v954
          %v968 = vpop.permute.xlu0 %967
          %969 = vset.pattern.permute.xlu0 0
          %970 = vperm.xlu0 %969, %v955
          %v971 = vpop.permute.xlu0 %970
          %972 = vset.pattern.permute.xlu0 0
          %973 = vperm.xlu0 %972, %v956
          %v974 = vpop.permute.xlu0 %973
          %975 = vset.pattern.permute.xlu0 0
          %976 = vperm.xlu0 %975, %v957
          %v977 = vpop.permute.xlu0 %976
          %978 = vset.pattern.permute.xlu0 0
          %979 = vperm.xlu0 %978, %v958
          %v980 = vpop.permute.xlu0 %979
          %981 = vset.pattern.permute.xlu0 0
          %982 = vperm.xlu0 %981, %v959
          %v983 = vpop.permute.xlu0 %982
          %vm984 = vcmp.eq.s32.totalorder %v962, %v388
          %vm985 = vcmp.eq.s32.totalorder %v962, %v389
          %vm986 = vcmp.eq.s32.totalorder %v962, %v390
          %vm987 = vcmp.eq.s32.totalorder %v962, %v391
          %vm988 = vcmp.eq.s32.totalorder %v965, %v388
          %vm989 = vcmp.eq.s32.totalorder %v965, %v389
          %vm990 = vcmp.eq.s32.totalorder %v965, %v390
          %vm991 = vcmp.eq.s32.totalorder %v965, %v391
          %vm992 = vcmp.eq.s32.totalorder %v968, %v388
          %vm993 = vcmp.eq.s32.totalorder %v968, %v389
          %vm994 = vcmp.eq.s32.totalorder %v968, %v390
          %vm995 = vcmp.eq.s32.totalorder %v968, %v391
          %vm996 = vcmp.eq.s32.totalorder %v971, %v388
          %vm997 = vcmp.eq.s32.totalorder %v971, %v389
          %vm998 = vcmp.eq.s32.totalorder %v971, %v390
          %vm999 = vcmp.eq.s32.totalorder %v971, %v391
          %vm1000 = vcmp.eq.s32.totalorder %v974, %v388
          %vm1001 = vcmp.eq.s32.totalorder %v974, %v389
          %vm1002 = vcmp.eq.s32.totalorder %v974, %v390
          %vm1003 = vcmp.eq.s32.totalorder %v974, %v391
          %vm1004 = vcmp.eq.s32.totalorder %v977, %v388
          %vm1005 = vcmp.eq.s32.totalorder %v977, %v389
          %vm1006 = vcmp.eq.s32.totalorder %v977, %v390
          %vm1007 = vcmp.eq.s32.totalorder %v977, %v391
          %vm1008 = vcmp.eq.s32.totalorder %v980, %v388
          %vm1009 = vcmp.eq.s32.totalorder %v980, %v389
          %vm1010 = vcmp.eq.s32.totalorder %v980, %v390
          %vm1011 = vcmp.eq.s32.totalorder %v980, %v391
          %vm1012 = vcmp.eq.s32.totalorder %v983, %v388
          %vm1013 = vcmp.eq.s32.totalorder %v983, %v389
          %vm1014 = vcmp.eq.s32.totalorder %v983, %v390
          %vm1015 = vcmp.eq.s32.totalorder %v983, %v391
          %v1016 = vld [vmem:[%s355 + $0x40] sm:$0xff]
          %v1017 = vld [vmem:[%s355 + $0x48] sm:$0xff]
          %v1018 = vld [vmem:[%s355 + $0x50] sm:$0xff]
          %v1019 = vld [vmem:[%s355 + $0x58] sm:$0xff]
          %v1020 = vld [vmem:[%s355 + $0x60] sm:$0xff]
          %v1021 = vld [vmem:[%s355 + $0x68] sm:$0xff]
          %v1022 = vld [vmem:[%s355 + $0x70] sm:$0xff]
          %v1023 = vld [vmem:[%s355 + $0x78] sm:$0xff]
          %1025 = vset.pattern.permute.xlu0 0
          %1026 = vperm.xlu0 %1025, %v1016
          %v1027 = vpop.permute.xlu0 %1026
          %1030 = vset.pattern.permute.xlu0 0
          %1031 = vperm.xlu0 %1030, %v1017
          %v1032 = vpop.permute.xlu0 %1031
          %1035 = vset.pattern.permute.xlu0 0
          %1036 = vperm.xlu0 %1035, %v1018
          %v1037 = vpop.permute.xlu0 %1036
          %1040 = vset.pattern.permute.xlu0 0
          %1041 = vperm.xlu0 %1040, %v1019
          %v1042 = vpop.permute.xlu0 %1041
          %1045 = vset.pattern.permute.xlu0 0
          %1046 = vperm.xlu0 %1045, %v1020
          %v1047 = vpop.permute.xlu0 %1046
          %1050 = vset.pattern.permute.xlu0 0
          %1051 = vperm.xlu0 %1050, %v1021
          %v1052 = vpop.permute.xlu0 %1051
          %1055 = vset.pattern.permute.xlu0 0
          %1056 = vperm.xlu0 %1055, %v1022
          %v1057 = vpop.permute.xlu0 %1056
          %1060 = vset.pattern.permute.xlu0 0
          %1061 = vperm.xlu0 %1060, %v1023
          %v1062 = vpop.permute.xlu0 %1061
          %v1064 = vsel %vm984, %v1027, 0.0
          %v1065 = vsel %vm985, %v1027, 0.0
          %v1066 = vsel %vm986, %v1027, 0.0
          %v1067 = vsel %vm987, %v1027, 0.0
          %v1068 = vsel %vm988, %v1032, 0.0
          %v1069 = vsel %vm989, %v1032, 0.0
          %v1070 = vsel %vm990, %v1032, 0.0
          %v1071 = vsel %vm991, %v1032, 0.0
          %v1072 = vsel %vm992, %v1037, 0.0
          %v1073 = vsel %vm993, %v1037, 0.0
          %v1074 = vsel %vm994, %v1037, 0.0
          %v1075 = vsel %vm995, %v1037, 0.0
          %v1076 = vsel %vm996, %v1042, 0.0
          %v1077 = vsel %vm997, %v1042, 0.0
          %v1078 = vsel %vm998, %v1042, 0.0
          %v1079 = vsel %vm999, %v1042, 0.0
          %v1080 = vsel %vm1000, %v1047, 0.0
          %v1081 = vsel %vm1001, %v1047, 0.0
          %v1082 = vsel %vm1002, %v1047, 0.0
          %v1083 = vsel %vm1003, %v1047, 0.0
          %v1084 = vsel %vm1004, %v1052, 0.0
          %v1085 = vsel %vm1005, %v1052, 0.0
          %v1086 = vsel %vm1006, %v1052, 0.0
          %v1087 = vsel %vm1007, %v1052, 0.0
          %v1088 = vsel %vm1008, %v1057, 0.0
          %v1089 = vsel %vm1009, %v1057, 0.0
          %v1090 = vsel %vm1010, %v1057, 0.0
          %v1091 = vsel %vm1011, %v1057, 0.0
          %v1092 = vsel %vm1012, %v1062, 0.0
          %v1093 = vsel %vm1013, %v1062, 0.0
          %v1094 = vsel %vm1014, %v1062, 0.0
          %v1095 = vsel %vm1015, %v1062, 0.0
          %v1096 = vmax.f32 %v1064, %v1068
          %v1097 = vmax.f32 %v1096, %v1072
          %v1098 = vmax.f32 %v1097, %v1076
          %v1099 = vmax.f32 %v1098, %v1080
          %v1100 = vmax.f32 %v1099, %v1084
          %v1101 = vmax.f32 %v1100, %v1088
          %v1102 = vmax.f32 %v1101, %v1092
          %v1103 = vrot.slane %v1102, 4
          %v1104 = vmax.f32 %v1102, %v1103
          %v1105 = vrot.slane %v1104, 2
          %v1106 = vmax.f32 %v1104, %v1105
          %v1107 = vrot.slane %v1106, 1
          %v1108 = vmax.f32 %v1106, %v1107
          %v1109 = vmax.f32 %v1065, %v1069
          %v1110 = vmax.f32 %v1109, %v1073
          %v1111 = vmax.f32 %v1110, %v1077
          %v1112 = vmax.f32 %v1111, %v1081
          %v1113 = vmax.f32 %v1112, %v1085
          %v1114 = vmax.f32 %v1113, %v1089
          %v1115 = vmax.f32 %v1114, %v1093
          %v1116 = vrot.slane %v1115, 4
          %v1117 = vmax.f32 %v1115, %v1116
          %v1118 = vrot.slane %v1117, 2
          %v1119 = vmax.f32 %v1117, %v1118
          %v1120 = vrot.slane %v1119, 1
          %v1121 = vmax.f32 %v1119, %v1120
          %v1122 = vmax.f32 %v1066, %v1070
          %v1123 = vmax.f32 %v1122, %v1074
          %v1124 = vmax.f32 %v1123, %v1078
          %v1125 = vmax.f32 %v1124, %v1082
          %v1126 = vmax.f32 %v1125, %v1086
          %v1127 = vmax.f32 %v1126, %v1090
          %v1128 = vmax.f32 %v1127, %v1094
          %v1129 = vrot.slane %v1128, 4
          %v1130 = vmax.f32 %v1128, %v1129
          %v1131 = vrot.slane %v1130, 2
          %v1132 = vmax.f32 %v1130, %v1131
          %v1133 = vrot.slane %v1132, 1
          %v1134 = vmax.f32 %v1132, %v1133
          %v1135 = vmax.f32 %v1067, %v1071
          %v1136 = vmax.f32 %v1135, %v1075
          %v1137 = vmax.f32 %v1136, %v1079
          %v1138 = vmax.f32 %v1137, %v1083
          %v1139 = vmax.f32 %v1138, %v1087
          %v1140 = vmax.f32 %v1139, %v1091
          %v1141 = vmax.f32 %v1140, %v1095
          %v1142 = vrot.slane %v1141, 4
          %v1143 = vmax.f32 %v1141, %v1142
          %v1144 = vrot.slane %v1143, 2
          %v1145 = vmax.f32 %v1143, %v1144
          %v1146 = vrot.slane %v1145, 1
          %v1147 = vmax.f32 %v1145, %v1146
          %v1148 = vmax.f32 %v588, %v1108
          %v1149 = vmax.f32 %v589, %v1121
          %v1150 = vmax.f32 %v590, %v1134
          %v1151 = vmax.f32 %v591, %v1147
          %1152 = vset.pattern.permute.xlu0 1
          %1153 = vperm.xlu0 %1152, %v1016
          %v1154 = vpop.permute.xlu0 %1153
          %1156 = vset.pattern.permute.xlu0 1
          %1157 = vperm.xlu0 %1156, %v1017
          %v1158 = vpop.permute.xlu0 %1157
          %1160 = vset.pattern.permute.xlu0 1
          %1161 = vperm.xlu0 %1160, %v1018
          %v1162 = vpop.permute.xlu0 %1161
          %1164 = vset.pattern.permute.xlu0 1
          %1165 = vperm.xlu0 %1164, %v1019
          %v1166 = vpop.permute.xlu0 %1165
          %1168 = vset.pattern.permute.xlu0 1
          %1169 = vperm.xlu0 %1168, %v1020
          %v1170 = vpop.permute.xlu0 %1169
          %1172 = vset.pattern.permute.xlu0 1
          %1173 = vperm.xlu0 %1172, %v1021
          %v1174 = vpop.permute.xlu0 %1173
          %1176 = vset.pattern.permute.xlu0 1
          %1177 = vperm.xlu0 %1176, %v1022
          %v1178 = vpop.permute.xlu0 %1177
          %1180 = vset.pattern.permute.xlu0 1
          %1181 = vperm.xlu0 %1180, %v1023
          %v1182 = vpop.permute.xlu0 %1181
          %v1184 = vsel %vm984, %v1154, 0.0
          %v1185 = vsel %vm985, %v1154, 0.0
          %v1186 = vsel %vm986, %v1154, 0.0
          %v1187 = vsel %vm987, %v1154, 0.0
          %v1188 = vsel %vm988, %v1158, 0.0
          %v1189 = vsel %vm989, %v1158, 0.0
          %v1190 = vsel %vm990, %v1158, 0.0
          %v1191 = vsel %vm991, %v1158, 0.0
          %v1192 = vsel %vm992, %v1162, 0.0
          %v1193 = vsel %vm993, %v1162, 0.0
          %v1194 = vsel %vm994, %v1162, 0.0
          %v1195 = vsel %vm995, %v1162, 0.0
          %v1196 = vsel %vm996, %v1166, 0.0
          %v1197 = vsel %vm997, %v1166, 0.0
          %v1198 = vsel %vm998, %v1166, 0.0
          %v1199 = vsel %vm999, %v1166, 0.0
          %v1200 = vsel %vm1000, %v1170, 0.0
          %v1201 = vsel %vm1001, %v1170, 0.0
          %v1202 = vsel %vm1002, %v1170, 0.0
          %v1203 = vsel %vm1003, %v1170, 0.0
          %v1204 = vsel %vm1004, %v1174, 0.0
          %v1205 = vsel %vm1005, %v1174, 0.0
          %v1206 = vsel %vm1006, %v1174, 0.0
          %v1207 = vsel %vm1007, %v1174, 0.0
          %v1208 = vsel %vm1008, %v1178, 0.0
          %v1209 = vsel %vm1009, %v1178, 0.0
          %v1210 = vsel %vm1010, %v1178, 0.0
          %v1211 = vsel %vm1011, %v1178, 0.0
          %v1212 = vsel %vm1012, %v1182, 0.0
          %v1213 = vsel %vm1013, %v1182, 0.0
          %v1214 = vsel %vm1014, %v1182, 0.0
          %v1215 = vsel %vm1015, %v1182, 0.0
          %v1216 = vmax.f32 %v1184, %v1188
          %v1217 = vmax.f32 %v1216, %v1192
          %v1218 = vmax.f32 %v1217, %v1196
          %v1219 = vmax.f32 %v1218, %v1200
          %v1220 = vmax.f32 %v1219, %v1204
          %v1221 = vmax.f32 %v1220, %v1208
          %v1222 = vmax.f32 %v1221, %v1212
          %v1223 = vrot.slane %v1222, 4
          %v1224 = vmax.f32 %v1222, %v1223
          %v1225 = vrot.slane %v1224, 2
          %v1226 = vmax.f32 %v1224, %v1225
          %v1227 = vrot.slane %v1226, 1
          %v1228 = vmax.f32 %v1226, %v1227
          %v1229 = vmax.f32 %v1185, %v1189
          %v1230 = vmax.f32 %v1229, %v1193
          %v1231 = vmax.f32 %v1230, %v1197
          %v1232 = vmax.f32 %v1231, %v1201
          %v1233 = vmax.f32 %v1232, %v1205
          %v1234 = vmax.f32 %v1233, %v1209
          %v1235 = vmax.f32 %v1234, %v1213
          %v1236 = vrot.slane %v1235, 4
          %v1237 = vmax.f32 %v1235, %v1236
          %v1238 = vrot.slane %v1237, 2
          %v1239 = vmax.f32 %v1237, %v1238
          %v1240 = vrot.slane %v1239, 1
          %v1241 = vmax.f32 %v1239, %v1240
          %v1242 = vmax.f32 %v1186, %v1190
          %v1243 = vmax.f32 %v1242, %v1194
          %v1244 = vmax.f32 %v1243, %v1198
          %v1245 = vmax.f32 %v1244, %v1202
          %v1246 = vmax.f32 %v1245, %v1206
          %v1247 = vmax.f32 %v1246, %v1210
          %v1248 = vmax.f32 %v1247, %v1214
          %v1249 = vrot.slane %v1248, 4
          %v1250 = vmax.f32 %v1248, %v1249
          %v1251 = vrot.slane %v1250, 2
          %v1252 = vmax.f32 %v1250, %v1251
          %v1253 = vrot.slane %v1252, 1
          %v1254 = vmax.f32 %v1252, %v1253
          %v1255 = vmax.f32 %v1187, %v1191
          %v1256 = vmax.f32 %v1255, %v1195
          %v1257 = vmax.f32 %v1256, %v1199
          %v1258 = vmax.f32 %v1257, %v1203
          %v1259 = vmax.f32 %v1258, %v1207
          %v1260 = vmax.f32 %v1259, %v1211
          %v1261 = vmax.f32 %v1260, %v1215
          %v1262 = vrot.slane %v1261, 4
          %v1263 = vmax.f32 %v1261, %v1262
          %v1264 = vrot.slane %v1263, 2
          %v1265 = vmax.f32 %v1263, %v1264
          %v1266 = vrot.slane %v1265, 1
          %v1267 = vmax.f32 %v1265, %v1266
          %v1268 = vmax.f32 %v708, %v1228
          %v1269 = vmax.f32 %v709, %v1241
          %v1270 = vmax.f32 %v710, %v1254
          %v1271 = vmax.f32 %v711, %v1267
          %1272 = vset.pattern.permute.xlu0 2
          %1273 = vperm.xlu0 %1272, %v1016
          %v1274 = vpop.permute.xlu0 %1273
          %1276 = vset.pattern.permute.xlu0 2
          %1277 = vperm.xlu0 %1276, %v1017
          %v1278 = vpop.permute.xlu0 %1277
          %1280 = vset.pattern.permute.xlu0 2
          %1281 = vperm.xlu0 %1280, %v1018
          %v1282 = vpop.permute.xlu0 %1281
          %1284 = vset.pattern.permute.xlu0 2
          %1285 = vperm.xlu0 %1284, %v1019
          %v1286 = vpop.permute.xlu0 %1285
          %1288 = vset.pattern.permute.xlu0 2
          %1289 = vperm.xlu0 %1288, %v1020
          %v1290 = vpop.permute.xlu0 %1289
          %1292 = vset.pattern.permute.xlu0 2
          %1293 = vperm.xlu0 %1292, %v1021
          %v1294 = vpop.permute.xlu0 %1293
          %1296 = vset.pattern.permute.xlu0 2
          %1297 = vperm.xlu0 %1296, %v1022
          %v1298 = vpop.permute.xlu0 %1297
          %1300 = vset.pattern.permute.xlu0 2
          %1301 = vperm.xlu0 %1300, %v1023
          %v1302 = vpop.permute.xlu0 %1301
          %v1304 = vsel %vm984, %v1274, 0.0
          %v1305 = vsel %vm985, %v1274, 0.0
          %v1306 = vsel %vm986, %v1274, 0.0
          %v1307 = vsel %vm987, %v1274, 0.0
          %v1308 = vsel %vm988, %v1278, 0.0
          %v1309 = vsel %vm989, %v1278, 0.0
          %v1310 = vsel %vm990, %v1278, 0.0
          %v1311 = vsel %vm991, %v1278, 0.0
          %v1312 = vsel %vm992, %v1282, 0.0
          %v1313 = vsel %vm993, %v1282, 0.0
          %v1314 = vsel %vm994, %v1282, 0.0
          %v1315 = vsel %vm995, %v1282, 0.0
          %v1316 = vsel %vm996, %v1286, 0.0
          %v1317 = vsel %vm997, %v1286, 0.0
          %v1318 = vsel %vm998, %v1286, 0.0
          %v1319 = vsel %vm999, %v1286, 0.0
          %v1320 = vsel %vm1000, %v1290, 0.0
          %v1321 = vsel %vm1001, %v1290, 0.0
          %v1322 = vsel %vm1002, %v1290, 0.0
          %v1323 = vsel %vm1003, %v1290, 0.0
          %v1324 = vsel %vm1004, %v1294, 0.0
          %v1325 = vsel %vm1005, %v1294, 0.0
          %v1326 = vsel %vm1006, %v1294, 0.0
          %v1327 = vsel %vm1007, %v1294, 0.0
          %v1328 = vsel %vm1008, %v1298, 0.0
          %v1329 = vsel %vm1009, %v1298, 0.0
          %v1330 = vsel %vm1010, %v1298, 0.0
          %v1331 = vsel %vm1011, %v1298, 0.0
          %v1332 = vsel %vm1012, %v1302, 0.0
          %v1333 = vsel %vm1013, %v1302, 0.0
          %v1334 = vsel %vm1014, %v1302, 0.0
          %v1335 = vsel %vm1015, %v1302, 0.0
          %v1336 = vmax.f32 %v1304, %v1308
          %v1337 = vmax.f32 %v1336, %v1312
          %v1338 = vmax.f32 %v1337, %v1316
          %v1339 = vmax.f32 %v1338, %v1320
          %v1340 = vmax.f32 %v1339, %v1324
          %v1341 = vmax.f32 %v1340, %v1328
          %v1342 = vmax.f32 %v1341, %v1332
          %v1343 = vrot.slane %v1342, 4
          %v1344 = vmax.f32 %v1342, %v1343
          %v1345 = vrot.slane %v1344, 2
          %v1346 = vmax.f32 %v1344, %v1345
          %v1347 = vrot.slane %v1346, 1
          %v1348 = vmax.f32 %v1346, %v1347
          %v1349 = vmax.f32 %v1305, %v1309
          %v1350 = vmax.f32 %v1349, %v1313
          %v1351 = vmax.f32 %v1350, %v1317
          %v1352 = vmax.f32 %v1351, %v1321
          %v1353 = vmax.f32 %v1352, %v1325
          %v1354 = vmax.f32 %v1353, %v1329
          %v1355 = vmax.f32 %v1354, %v1333
          %v1356 = vrot.slane %v1355, 4
          %v1357 = vmax.f32 %v1355, %v1356
          %v1358 = vrot.slane %v1357, 2
          %v1359 = vmax.f32 %v1357, %v1358
          %v1360 = vrot.slane %v1359, 1
          %v1361 = vmax.f32 %v1359, %v1360
          %v1362 = vmax.f32 %v1306, %v1310
          %v1363 = vmax.f32 %v1362, %v1314
          %v1364 = vmax.f32 %v1363, %v1318
          %v1365 = vmax.f32 %v1364, %v1322
          %v1366 = vmax.f32 %v1365, %v1326
          %v1367 = vmax.f32 %v1366, %v1330
          %v1368 = vmax.f32 %v1367, %v1334
          %v1369 = vrot.slane %v1368, 4
          %v1370 = vmax.f32 %v1368, %v1369
          %v1371 = vrot.slane %v1370, 2
          %v1372 = vmax.f32 %v1370, %v1371
          %v1373 = vrot.slane %v1372, 1
          %v1374 = vmax.f32 %v1372, %v1373
          %v1375 = vmax.f32 %v1307, %v1311
          %v1376 = vmax.f32 %v1375, %v1315
          %v1377 = vmax.f32 %v1376, %v1319
          %v1378 = vmax.f32 %v1377, %v1323
          %v1379 = vmax.f32 %v1378, %v1327
          %v1380 = vmax.f32 %v1379, %v1331
          %v1381 = vmax.f32 %v1380, %v1335
          %v1382 = vrot.slane %v1381, 4
          %v1383 = vmax.f32 %v1381, %v1382
          %v1384 = vrot.slane %v1383, 2
          %v1385 = vmax.f32 %v1383, %v1384
          %v1386 = vrot.slane %v1385, 1
          %v1387 = vmax.f32 %v1385, %v1386
          %v1388 = vmax.f32 %v828, %v1348
          %v1389 = vmax.f32 %v829, %v1361
          %v1390 = vmax.f32 %v830, %v1374
          %v1391 = vmax.f32 %v831, %v1387
          %1392 = vset.pattern.permute.xlu0 3
          %1393 = vperm.xlu0 %1392, %v1016
          %v1394 = vpop.permute.xlu0 %1393
          %1396 = vset.pattern.permute.xlu0 3
          %1397 = vperm.xlu0 %1396, %v1017
          %v1398 = vpop.permute.xlu0 %1397
          %1400 = vset.pattern.permute.xlu0 3
          %1401 = vperm.xlu0 %1400, %v1018
          %v1402 = vpop.permute.xlu0 %1401
          %1404 = vset.pattern.permute.xlu0 3
          %1405 = vperm.xlu0 %1404, %v1019
          %v1406 = vpop.permute.xlu0 %1405
          %1408 = vset.pattern.permute.xlu0 3
          %1409 = vperm.xlu0 %1408, %v1020
          %v1410 = vpop.permute.xlu0 %1409
          %1412 = vset.pattern.permute.xlu0 3
          %1413 = vperm.xlu0 %1412, %v1021
          %v1414 = vpop.permute.xlu0 %1413
          %1416 = vset.pattern.permute.xlu0 3
          %1417 = vperm.xlu0 %1416, %v1022
          %v1418 = vpop.permute.xlu0 %1417
          %1420 = vset.pattern.permute.xlu0 3
          %1421 = vperm.xlu0 %1420, %v1023
          %v1422 = vpop.permute.xlu0 %1421
          %v1424 = vsel %vm984, %v1394, 0.0
          %v1425 = vsel %vm985, %v1394, 0.0
          %v1426 = vsel %vm986, %v1394, 0.0
          %v1427 = vsel %vm987, %v1394, 0.0
          %v1428 = vsel %vm988, %v1398, 0.0
          %v1429 = vsel %vm989, %v1398, 0.0
          %v1430 = vsel %vm990, %v1398, 0.0
          %v1431 = vsel %vm991, %v1398, 0.0
          %v1432 = vsel %vm992, %v1402, 0.0
          %v1433 = vsel %vm993, %v1402, 0.0
          %v1434 = vsel %vm994, %v1402, 0.0
          %v1435 = vsel %vm995, %v1402, 0.0
          %v1436 = vsel %vm996, %v1406, 0.0
          %v1437 = vsel %vm997, %v1406, 0.0
          %v1438 = vsel %vm998, %v1406, 0.0
          %v1439 = vsel %vm999, %v1406, 0.0
          %v1440 = vsel %vm1000, %v1410, 0.0
          %v1441 = vsel %vm1001, %v1410, 0.0
          %v1442 = vsel %vm1002, %v1410, 0.0
          %v1443 = vsel %vm1003, %v1410, 0.0
          %v1444 = vsel %vm1004, %v1414, 0.0
          %v1445 = vsel %vm1005, %v1414, 0.0
          %v1446 = vsel %vm1006, %v1414, 0.0
          %v1447 = vsel %vm1007, %v1414, 0.0
          %v1448 = vsel %vm1008, %v1418, 0.0
          %v1449 = vsel %vm1009, %v1418, 0.0
          %v1450 = vsel %vm1010, %v1418, 0.0
          %v1451 = vsel %vm1011, %v1418, 0.0
          %v1452 = vsel %vm1012, %v1422, 0.0
          %v1453 = vsel %vm1013, %v1422, 0.0
          %v1454 = vsel %vm1014, %v1422, 0.0
          %v1455 = vsel %vm1015, %v1422, 0.0
          %v1456 = vmax.f32 %v1424, %v1428
          %v1457 = vmax.f32 %v1456, %v1432
          %v1458 = vmax.f32 %v1457, %v1436
          %v1459 = vmax.f32 %v1458, %v1440
          %v1460 = vmax.f32 %v1459, %v1444
          %v1461 = vmax.f32 %v1460, %v1448
          %v1462 = vmax.f32 %v1461, %v1452
          %v1463 = vrot.slane %v1462, 4
          %v1464 = vmax.f32 %v1462, %v1463
          %v1465 = vrot.slane %v1464, 2
          %v1466 = vmax.f32 %v1464, %v1465
          %v1467 = vrot.slane %v1466, 1
          %v1468 = vmax.f32 %v1466, %v1467
          %v1469 = vmax.f32 %v1425, %v1429
          %v1470 = vmax.f32 %v1469, %v1433
          %v1471 = vmax.f32 %v1470, %v1437
          %v1472 = vmax.f32 %v1471, %v1441
          %v1473 = vmax.f32 %v1472, %v1445
          %v1474 = vmax.f32 %v1473, %v1449
          %v1475 = vmax.f32 %v1474, %v1453
          %v1476 = vrot.slane %v1475, 4
          %v1477 = vmax.f32 %v1475, %v1476
          %v1478 = vrot.slane %v1477, 2
          %v1479 = vmax.f32 %v1477, %v1478
          %v1480 = vrot.slane %v1479, 1
          %v1481 = vmax.f32 %v1479, %v1480
          %v1482 = vmax.f32 %v1426, %v1430
          %v1483 = vmax.f32 %v1482, %v1434
          %v1484 = vmax.f32 %v1483, %v1438
          %v1485 = vmax.f32 %v1484, %v1442
          %v1486 = vmax.f32 %v1485, %v1446
          %v1487 = vmax.f32 %v1486, %v1450
          %v1488 = vmax.f32 %v1487, %v1454
          %v1489 = vrot.slane %v1488, 4
          %v1490 = vmax.f32 %v1488, %v1489
          %v1491 = vrot.slane %v1490, 2
          %v1492 = vmax.f32 %v1490, %v1491
          %v1493 = vrot.slane %v1492, 1
          %v1494 = vmax.f32 %v1492, %v1493
          %v1495 = vmax.f32 %v1427, %v1431
          %v1496 = vmax.f32 %v1495, %v1435
          %v1497 = vmax.f32 %v1496, %v1439
          %v1498 = vmax.f32 %v1497, %v1443
          %v1499 = vmax.f32 %v1498, %v1447
          %v1500 = vmax.f32 %v1499, %v1451
          %v1501 = vmax.f32 %v1500, %v1455
          %v1502 = vrot.slane %v1501, 4
          %v1503 = vmax.f32 %v1501, %v1502
          %v1504 = vrot.slane %v1503, 2
          %v1505 = vmax.f32 %v1503, %v1504
          %v1506 = vrot.slane %v1505, 1
          %v1507 = vmax.f32 %v1505, %v1506
          %v1508 = vmax.f32 %v948, %v1468
          %v1509 = vmax.f32 %v949, %v1481
          %v1510 = vmax.f32 %v950, %v1494
          %v1511 = vmax.f32 %v951, %v1507
          %v1512 = vld [vmem:[%s325 + $0x80] sm:$0xff]
          %v1513 = vld [vmem:[%s325 + $0x88] sm:$0xff]
          %v1514 = vld [vmem:[%s325 + $0x90] sm:$0xff]
          %v1515 = vld [vmem:[%s325 + $0x98] sm:$0xff]
          %v1516 = vld [vmem:[%s325 + $0xa0] sm:$0xff]
          %v1517 = vld [vmem:[%s325 + $0xa8] sm:$0xff]
          %v1518 = vld [vmem:[%s325 + $0xb0] sm:$0xff]
          %v1519 = vld [vmem:[%s325 + $0xb8] sm:$0xff]
          %1520 = vset.pattern.permute.xlu0 0
          %1521 = vperm.xlu0 %1520, %v1512
          %v1522 = vpop.permute.xlu0 %1521
          %1523 = vset.pattern.permute.xlu0 0
          %1524 = vperm.xlu0 %1523, %v1513
          %v1525 = vpop.permute.xlu0 %1524
          %1526 = vset.pattern.permute.xlu0 0
          %1527 = vperm.xlu0 %1526, %v1514
          %v1528 = vpop.permute.xlu0 %1527
          %1529 = vset.pattern.permute.xlu0 0
          %1530 = vperm.xlu0 %1529, %v1515
          %v1531 = vpop.permute.xlu0 %1530
          %1532 = vset.pattern.permute.xlu0 0
          %1533 = vperm.xlu0 %1532, %v1516
          %v1534 = vpop.permute.xlu0 %1533
          %1535 = vset.pattern.permute.xlu0 0
          %1536 = vperm.xlu0 %1535, %v1517
          %v1537 = vpop.permute.xlu0 %1536
          %1538 = vset.pattern.permute.xlu0 0
          %1539 = vperm.xlu0 %1538, %v1518
          %v1540 = vpop.permute.xlu0 %1539
          %1541 = vset.pattern.permute.xlu0 0
          %1542 = vperm.xlu0 %1541, %v1519
          %v1543 = vpop.permute.xlu0 %1542
          %vm1544 = vcmp.eq.s32.totalorder %v1522, %v388
          %vm1545 = vcmp.eq.s32.totalorder %v1522, %v389
          %vm1546 = vcmp.eq.s32.totalorder %v1522, %v390
          %vm1547 = vcmp.eq.s32.totalorder %v1522, %v391
          %vm1548 = vcmp.eq.s32.totalorder %v1525, %v388
          %vm1549 = vcmp.eq.s32.totalorder %v1525, %v389
          %vm1550 = vcmp.eq.s32.totalorder %v1525, %v390
          %vm1551 = vcmp.eq.s32.totalorder %v1525, %v391
          %vm1552 = vcmp.eq.s32.totalorder %v1528, %v388
          %vm1553 = vcmp.eq.s32.totalorder %v1528, %v389
          %vm1554 = vcmp.eq.s32.totalorder %v1528, %v390
          %vm1555 = vcmp.eq.s32.totalorder %v1528, %v391
          %vm1556 = vcmp.eq.s32.totalorder %v1531, %v388
          %vm1557 = vcmp.eq.s32.totalorder %v1531, %v389
          %vm1558 = vcmp.eq.s32.totalorder %v1531, %v390
          %vm1559 = vcmp.eq.s32.totalorder %v1531, %v391
          %vm1560 = vcmp.eq.s32.totalorder %v1534, %v388
          %vm1561 = vcmp.eq.s32.totalorder %v1534, %v389
          %vm1562 = vcmp.eq.s32.totalorder %v1534, %v390
          %vm1563 = vcmp.eq.s32.totalorder %v1534, %v391
          %vm1564 = vcmp.eq.s32.totalorder %v1537, %v388
          %vm1565 = vcmp.eq.s32.totalorder %v1537, %v389
          %vm1566 = vcmp.eq.s32.totalorder %v1537, %v390
          %vm1567 = vcmp.eq.s32.totalorder %v1537, %v391
          %vm1568 = vcmp.eq.s32.totalorder %v1540, %v388
          %vm1569 = vcmp.eq.s32.totalorder %v1540, %v389
          %vm1570 = vcmp.eq.s32.totalorder %v1540, %v390
          %vm1571 = vcmp.eq.s32.totalorder %v1540, %v391
          %vm1572 = vcmp.eq.s32.totalorder %v1543, %v388
          %vm1573 = vcmp.eq.s32.totalorder %v1543, %v389
          %vm1574 = vcmp.eq.s32.totalorder %v1543, %v390
          %vm1575 = vcmp.eq.s32.totalorder %v1543, %v391
          %v1576 = vld [vmem:[%s355 + $0x80] sm:$0xff]
          %v1577 = vld [vmem:[%s355 + $0x88] sm:$0xff]
          %v1578 = vld [vmem:[%s355 + $0x90] sm:$0xff]
          %v1579 = vld [vmem:[%s355 + $0x98] sm:$0xff]
          %v1580 = vld [vmem:[%s355 + $0xa0] sm:$0xff]
          %v1581 = vld [vmem:[%s355 + $0xa8] sm:$0xff]
          %v1582 = vld [vmem:[%s355 + $0xb0] sm:$0xff]
          %v1583 = vld [vmem:[%s355 + $0xb8] sm:$0xff]
          %1585 = vset.pattern.permute.xlu0 0
          %1586 = vperm.xlu0 %1585, %v1576
          %v1587 = vpop.permute.xlu0 %1586
          %1590 = vset.pattern.permute.xlu0 0
          %1591 = vperm.xlu0 %1590, %v1577
          %v1592 = vpop.permute.xlu0 %1591
          %1595 = vset.pattern.permute.xlu0 0
          %1596 = vperm.xlu0 %1595, %v1578
          %v1597 = vpop.permute.xlu0 %1596
          %1600 = vset.pattern.permute.xlu0 0
          %1601 = vperm.xlu0 %1600, %v1579
          %v1602 = vpop.permute.xlu0 %1601
          %1605 = vset.pattern.permute.xlu0 0
          %1606 = vperm.xlu0 %1605, %v1580
          %v1607 = vpop.permute.xlu0 %1606
          %1610 = vset.pattern.permute.xlu0 0
          %1611 = vperm.xlu0 %1610, %v1581
          %v1612 = vpop.permute.xlu0 %1611
          %1615 = vset.pattern.permute.xlu0 0
          %1616 = vperm.xlu0 %1615, %v1582
          %v1617 = vpop.permute.xlu0 %1616
          %1620 = vset.pattern.permute.xlu0 0
          %1621 = vperm.xlu0 %1620, %v1583
          %v1622 = vpop.permute.xlu0 %1621
          %v1624 = vsel %vm1544, %v1587, 0.0
          %v1625 = vsel %vm1545, %v1587, 0.0
          %v1626 = vsel %vm1546, %v1587, 0.0
          %v1627 = vsel %vm1547, %v1587, 0.0
          %v1628 = vsel %vm1548, %v1592, 0.0
          %v1629 = vsel %vm1549, %v1592, 0.0
          %v1630 = vsel %vm1550, %v1592, 0.0
          %v1631 = vsel %vm1551, %v1592, 0.0
          %v1632 = vsel %vm1552, %v1597, 0.0
          %v1633 = vsel %vm1553, %v1597, 0.0
          %v1634 = vsel %vm1554, %v1597, 0.0
          %v1635 = vsel %vm1555, %v1597, 0.0
          %v1636 = vsel %vm1556, %v1602, 0.0
          %v1637 = vsel %vm1557, %v1602, 0.0
          %v1638 = vsel %vm1558, %v1602, 0.0
          %v1639 = vsel %vm1559, %v1602, 0.0
          %v1640 = vsel %vm1560, %v1607, 0.0
          %v1641 = vsel %vm1561, %v1607, 0.0
          %v1642 = vsel %vm1562, %v1607, 0.0
          %v1643 = vsel %vm1563, %v1607, 0.0
          %v1644 = vsel %vm1564, %v1612, 0.0
          %v1645 = vsel %vm1565, %v1612, 0.0
          %v1646 = vsel %vm1566, %v1612, 0.0
          %v1647 = vsel %vm1567, %v1612, 0.0
          %v1648 = vsel %vm1568, %v1617, 0.0
          %v1649 = vsel %vm1569, %v1617, 0.0
          %v1650 = vsel %vm1570, %v1617, 0.0
          %v1651 = vsel %vm1571, %v1617, 0.0
          %v1652 = vsel %vm1572, %v1622, 0.0
          %v1653 = vsel %vm1573, %v1622, 0.0
          %v1654 = vsel %vm1574, %v1622, 0.0
          %v1655 = vsel %vm1575, %v1622, 0.0
          %v1656 = vmax.f32 %v1624, %v1628
          %v1657 = vmax.f32 %v1656, %v1632
          %v1658 = vmax.f32 %v1657, %v1636
          %v1659 = vmax.f32 %v1658, %v1640
          %v1660 = vmax.f32 %v1659, %v1644
          %v1661 = vmax.f32 %v1660, %v1648
          %v1662 = vmax.f32 %v1661, %v1652
          %v1663 = vrot.slane %v1662, 4
          %v1664 = vmax.f32 %v1662, %v1663
          %v1665 = vrot.slane %v1664, 2
          %v1666 = vmax.f32 %v1664, %v1665
          %v1667 = vrot.slane %v1666, 1
          %v1668 = vmax.f32 %v1666, %v1667
          %v1669 = vmax.f32 %v1625, %v1629
          %v1670 = vmax.f32 %v1669, %v1633
          %v1671 = vmax.f32 %v1670, %v1637
          %v1672 = vmax.f32 %v1671, %v1641
          %v1673 = vmax.f32 %v1672, %v1645
          %v1674 = vmax.f32 %v1673, %v1649
          %v1675 = vmax.f32 %v1674, %v1653
          %v1676 = vrot.slane %v1675, 4
          %v1677 = vmax.f32 %v1675, %v1676
          %v1678 = vrot.slane %v1677, 2
          %v1679 = vmax.f32 %v1677, %v1678
          %v1680 = vrot.slane %v1679, 1
          %v1681 = vmax.f32 %v1679, %v1680
          %v1682 = vmax.f32 %v1626, %v1630
          %v1683 = vmax.f32 %v1682, %v1634
          %v1684 = vmax.f32 %v1683, %v1638
          %v1685 = vmax.f32 %v1684, %v1642
          %v1686 = vmax.f32 %v1685, %v1646
          %v1687 = vmax.f32 %v1686, %v1650
          %v1688 = vmax.f32 %v1687, %v1654
          %v1689 = vrot.slane %v1688, 4
          %v1690 = vmax.f32 %v1688, %v1689
          %v1691 = vrot.slane %v1690, 2
          %v1692 = vmax.f32 %v1690, %v1691
          %v1693 = vrot.slane %v1692, 1
          %v1694 = vmax.f32 %v1692, %v1693
          %v1695 = vmax.f32 %v1627, %v1631
          %v1696 = vmax.f32 %v1695, %v1635
          %v1697 = vmax.f32 %v1696, %v1639
          %v1698 = vmax.f32 %v1697, %v1643
          %v1699 = vmax.f32 %v1698, %v1647
          %v1700 = vmax.f32 %v1699, %v1651
          %v1701 = vmax.f32 %v1700, %v1655
          %v1702 = vrot.slane %v1701, 4
          %v1703 = vmax.f32 %v1701, %v1702
          %v1704 = vrot.slane %v1703, 2
          %v1705 = vmax.f32 %v1703, %v1704
          %v1706 = vrot.slane %v1705, 1
          %v1707 = vmax.f32 %v1705, %v1706
          %v1708 = vmax.f32 %v1148, %v1668
          %v1709 = vmax.f32 %v1149, %v1681
          %v1710 = vmax.f32 %v1150, %v1694
          %v1711 = vmax.f32 %v1151, %v1707
          %1712 = vset.pattern.permute.xlu0 1
          %1713 = vperm.xlu0 %1712, %v1576
          %v1714 = vpop.permute.xlu0 %1713
          %1716 = vset.pattern.permute.xlu0 1
          %1717 = vperm.xlu0 %1716, %v1577
          %v1718 = vpop.permute.xlu0 %1717
          %1720 = vset.pattern.permute.xlu0 1
          %1721 = vperm.xlu0 %1720, %v1578
          %v1722 = vpop.permute.xlu0 %1721
          %1724 = vset.pattern.permute.xlu0 1
          %1725 = vperm.xlu0 %1724, %v1579
          %v1726 = vpop.permute.xlu0 %1725
          %1728 = vset.pattern.permute.xlu0 1
          %1729 = vperm.xlu0 %1728, %v1580
          %v1730 = vpop.permute.xlu0 %1729
          %1732 = vset.pattern.permute.xlu0 1
          %1733 = vperm.xlu0 %1732, %v1581
          %v1734 = vpop.permute.xlu0 %1733
          %1736 = vset.pattern.permute.xlu0 1
          %1737 = vperm.xlu0 %1736, %v1582
          %v1738 = vpop.permute.xlu0 %1737
          %1740 = vset.pattern.permute.xlu0 1
          %1741 = vperm.xlu0 %1740, %v1583
          %v1742 = vpop.permute.xlu0 %1741
          %v1744 = vsel %vm1544, %v1714, 0.0
          %v1745 = vsel %vm1545, %v1714, 0.0
          %v1746 = vsel %vm1546, %v1714, 0.0
          %v1747 = vsel %vm1547, %v1714, 0.0
          %v1748 = vsel %vm1548, %v1718, 0.0
          %v1749 = vsel %vm1549, %v1718, 0.0
          %v1750 = vsel %vm1550, %v1718, 0.0
          %v1751 = vsel %vm1551, %v1718, 0.0
          %v1752 = vsel %vm1552, %v1722, 0.0
          %v1753 = vsel %vm1553, %v1722, 0.0
          %v1754 = vsel %vm1554, %v1722, 0.0
          %v1755 = vsel %vm1555, %v1722, 0.0
          %v1756 = vsel %vm1556, %v1726, 0.0
          %v1757 = vsel %vm1557, %v1726, 0.0
          %v1758 = vsel %vm1558, %v1726, 0.0
          %v1759 = vsel %vm1559, %v1726, 0.0
          %v1760 = vsel %vm1560, %v1730, 0.0
          %v1761 = vsel %vm1561, %v1730, 0.0
          %v1762 = vsel %vm1562, %v1730, 0.0
          %v1763 = vsel %vm1563, %v1730, 0.0
          %v1764 = vsel %vm1564, %v1734, 0.0
          %v1765 = vsel %vm1565, %v1734, 0.0
          %v1766 = vsel %vm1566, %v1734, 0.0
          %v1767 = vsel %vm1567, %v1734, 0.0
          %v1768 = vsel %vm1568, %v1738, 0.0
          %v1769 = vsel %vm1569, %v1738, 0.0
          %v1770 = vsel %vm1570, %v1738, 0.0
          %v1771 = vsel %vm1571, %v1738, 0.0
          %v1772 = vsel %vm1572, %v1742, 0.0
          %v1773 = vsel %vm1573, %v1742, 0.0
          %v1774 = vsel %vm1574, %v1742, 0.0
          %v1775 = vsel %vm1575, %v1742, 0.0
          %v1776 = vmax.f32 %v1744, %v1748
          %v1777 = vmax.f32 %v1776, %v1752
          %v1778 = vmax.f32 %v1777, %v1756
          %v1779 = vmax.f32 %v1778, %v1760
          %v1780 = vmax.f32 %v1779, %v1764
          %v1781 = vmax.f32 %v1780, %v1768
          %v1782 = vmax.f32 %v1781, %v1772
          %v1783 = vrot.slane %v1782, 4
          %v1784 = vmax.f32 %v1782, %v1783
          %v1785 = vrot.slane %v1784, 2
          %v1786 = vmax.f32 %v1784, %v1785
          %v1787 = vrot.slane %v1786, 1
          %v1788 = vmax.f32 %v1786, %v1787
          %v1789 = vmax.f32 %v1745, %v1749
          %v1790 = vmax.f32 %v1789, %v1753
          %v1791 = vmax.f32 %v1790, %v1757
          %v1792 = vmax.f32 %v1791, %v1761
          %v1793 = vmax.f32 %v1792, %v1765
          %v1794 = vmax.f32 %v1793, %v1769
          %v1795 = vmax.f32 %v1794, %v1773
          %v1796 = vrot.slane %v1795, 4
          %v1797 = vmax.f32 %v1795, %v1796
          %v1798 = vrot.slane %v1797, 2
          %v1799 = vmax.f32 %v1797, %v1798
          %v1800 = vrot.slane %v1799, 1
          %v1801 = vmax.f32 %v1799, %v1800
          %v1802 = vmax.f32 %v1746, %v1750
          %v1803 = vmax.f32 %v1802, %v1754
          %v1804 = vmax.f32 %v1803, %v1758
          %v1805 = vmax.f32 %v1804, %v1762
          %v1806 = vmax.f32 %v1805, %v1766
          %v1807 = vmax.f32 %v1806, %v1770
          %v1808 = vmax.f32 %v1807, %v1774
          %v1809 = vrot.slane %v1808, 4
          %v1810 = vmax.f32 %v1808, %v1809
          %v1811 = vrot.slane %v1810, 2
          %v1812 = vmax.f32 %v1810, %v1811
          %v1813 = vrot.slane %v1812, 1
          %v1814 = vmax.f32 %v1812, %v1813
          %v1815 = vmax.f32 %v1747, %v1751
          %v1816 = vmax.f32 %v1815, %v1755
          %v1817 = vmax.f32 %v1816, %v1759
          %v1818 = vmax.f32 %v1817, %v1763
          %v1819 = vmax.f32 %v1818, %v1767
          %v1820 = vmax.f32 %v1819, %v1771
          %v1821 = vmax.f32 %v1820, %v1775
          %v1822 = vrot.slane %v1821, 4
          %v1823 = vmax.f32 %v1821, %v1822
          %v1824 = vrot.slane %v1823, 2
          %v1825 = vmax.f32 %v1823, %v1824
          %v1826 = vrot.slane %v1825, 1
          %v1827 = vmax.f32 %v1825, %v1826
          %v1828 = vmax.f32 %v1268, %v1788
          %v1829 = vmax.f32 %v1269, %v1801
          %v1830 = vmax.f32 %v1270, %v1814
          %v1831 = vmax.f32 %v1271, %v1827
          %1832 = vset.pattern.permute.xlu0 2
          %1833 = vperm.xlu0 %1832, %v1576
          %v1834 = vpop.permute.xlu0 %1833
          %1836 = vset.pattern.permute.xlu0 2
          %1837 = vperm.xlu0 %1836, %v1577
          %v1838 = vpop.permute.xlu0 %1837
          %1840 = vset.pattern.permute.xlu0 2
          %1841 = vperm.xlu0 %1840, %v1578
          %v1842 = vpop.permute.xlu0 %1841
          %1844 = vset.pattern.permute.xlu0 2
          %1845 = vperm.xlu0 %1844, %v1579
          %v1846 = vpop.permute.xlu0 %1845
          %1848 = vset.pattern.permute.xlu0 2
          %1849 = vperm.xlu0 %1848, %v1580
          %v1850 = vpop.permute.xlu0 %1849
          %1852 = vset.pattern.permute.xlu0 2
          %1853 = vperm.xlu0 %1852, %v1581
          %v1854 = vpop.permute.xlu0 %1853
          %1856 = vset.pattern.permute.xlu0 2
          %1857 = vperm.xlu0 %1856, %v1582
          %v1858 = vpop.permute.xlu0 %1857
          %1860 = vset.pattern.permute.xlu0 2
          %1861 = vperm.xlu0 %1860, %v1583
          %v1862 = vpop.permute.xlu0 %1861
          %v1864 = vsel %vm1544, %v1834, 0.0
          %v1865 = vsel %vm1545, %v1834, 0.0
          %v1866 = vsel %vm1546, %v1834, 0.0
          %v1867 = vsel %vm1547, %v1834, 0.0
          %v1868 = vsel %vm1548, %v1838, 0.0
          %v1869 = vsel %vm1549, %v1838, 0.0
          %v1870 = vsel %vm1550, %v1838, 0.0
          %v1871 = vsel %vm1551, %v1838, 0.0
          %v1872 = vsel %vm1552, %v1842, 0.0
          %v1873 = vsel %vm1553, %v1842, 0.0
          %v1874 = vsel %vm1554, %v1842, 0.0
          %v1875 = vsel %vm1555, %v1842, 0.0
          %v1876 = vsel %vm1556, %v1846, 0.0
          %v1877 = vsel %vm1557, %v1846, 0.0
          %v1878 = vsel %vm1558, %v1846, 0.0
          %v1879 = vsel %vm1559, %v1846, 0.0
          %v1880 = vsel %vm1560, %v1850, 0.0
          %v1881 = vsel %vm1561, %v1850, 0.0
          %v1882 = vsel %vm1562, %v1850, 0.0
          %v1883 = vsel %vm1563, %v1850, 0.0
          %v1884 = vsel %vm1564, %v1854, 0.0
          %v1885 = vsel %vm1565, %v1854, 0.0
          %v1886 = vsel %vm1566, %v1854, 0.0
          %v1887 = vsel %vm1567, %v1854, 0.0
          %v1888 = vsel %vm1568, %v1858, 0.0
          %v1889 = vsel %vm1569, %v1858, 0.0
          %v1890 = vsel %vm1570, %v1858, 0.0
          %v1891 = vsel %vm1571, %v1858, 0.0
          %v1892 = vsel %vm1572, %v1862, 0.0
          %v1893 = vsel %vm1573, %v1862, 0.0
          %v1894 = vsel %vm1574, %v1862, 0.0
          %v1895 = vsel %vm1575, %v1862, 0.0
          %v1896 = vmax.f32 %v1864, %v1868
          %v1897 = vmax.f32 %v1896, %v1872
          %v1898 = vmax.f32 %v1897, %v1876
          %v1899 = vmax.f32 %v1898, %v1880
          %v1900 = vmax.f32 %v1899, %v1884
          %v1901 = vmax.f32 %v1900, %v1888
          %v1902 = vmax.f32 %v1901, %v1892
          %v1903 = vrot.slane %v1902, 4
          %v1904 = vmax.f32 %v1902, %v1903
          %v1905 = vrot.slane %v1904, 2
          %v1906 = vmax.f32 %v1904, %v1905
          %v1907 = vrot.slane %v1906, 1
          %v1908 = vmax.f32 %v1906, %v1907
          %v1909 = vmax.f32 %v1865, %v1869
          %v1910 = vmax.f32 %v1909, %v1873
          %v1911 = vmax.f32 %v1910, %v1877
          %v1912 = vmax.f32 %v1911, %v1881
          %v1913 = vmax.f32 %v1912, %v1885
          %v1914 = vmax.f32 %v1913, %v1889
          %v1915 = vmax.f32 %v1914, %v1893
          %v1916 = vrot.slane %v1915, 4
          %v1917 = vmax.f32 %v1915, %v1916
          %v1918 = vrot.slane %v1917, 2
          %v1919 = vmax.f32 %v1917, %v1918
          %v1920 = vrot.slane %v1919, 1
          %v1921 = vmax.f32 %v1919, %v1920
          %v1922 = vmax.f32 %v1866, %v1870
          %v1923 = vmax.f32 %v1922, %v1874
          %v1924 = vmax.f32 %v1923, %v1878
          %v1925 = vmax.f32 %v1924, %v1882
          %v1926 = vmax.f32 %v1925, %v1886
          %v1927 = vmax.f32 %v1926, %v1890
          %v1928 = vmax.f32 %v1927, %v1894
          %v1929 = vrot.slane %v1928, 4
          %v1930 = vmax.f32 %v1928, %v1929
          %v1931 = vrot.slane %v1930, 2
          %v1932 = vmax.f32 %v1930, %v1931
          %v1933 = vrot.slane %v1932, 1
          %v1934 = vmax.f32 %v1932, %v1933
          %v1935 = vmax.f32 %v1867, %v1871
          %v1936 = vmax.f32 %v1935, %v1875
          %v1937 = vmax.f32 %v1936, %v1879
          %v1938 = vmax.f32 %v1937, %v1883
          %v1939 = vmax.f32 %v1938, %v1887
          %v1940 = vmax.f32 %v1939, %v1891
          %v1941 = vmax.f32 %v1940, %v1895
          %v1942 = vrot.slane %v1941, 4
          %v1943 = vmax.f32 %v1941, %v1942
          %v1944 = vrot.slane %v1943, 2
          %v1945 = vmax.f32 %v1943, %v1944
          %v1946 = vrot.slane %v1945, 1
          %v1947 = vmax.f32 %v1945, %v1946
          %v1948 = vmax.f32 %v1388, %v1908
          %v1949 = vmax.f32 %v1389, %v1921
          %v1950 = vmax.f32 %v1390, %v1934
          %v1951 = vmax.f32 %v1391, %v1947
          %1952 = vset.pattern.permute.xlu0 3
          %1953 = vperm.xlu0 %1952, %v1576
          %v1954 = vpop.permute.xlu0 %1953
          %1956 = vset.pattern.permute.xlu0 3
          %1957 = vperm.xlu0 %1956, %v1577
          %v1958 = vpop.permute.xlu0 %1957
          %1960 = vset.pattern.permute.xlu0 3
          %1961 = vperm.xlu0 %1960, %v1578
          %v1962 = vpop.permute.xlu0 %1961
          %1964 = vset.pattern.permute.xlu0 3
          %1965 = vperm.xlu0 %1964, %v1579
          %v1966 = vpop.permute.xlu0 %1965
          %1968 = vset.pattern.permute.xlu0 3
          %1969 = vperm.xlu0 %1968, %v1580
          %v1970 = vpop.permute.xlu0 %1969
          %1972 = vset.pattern.permute.xlu0 3
          %1973 = vperm.xlu0 %1972, %v1581
          %v1974 = vpop.permute.xlu0 %1973
          %1976 = vset.pattern.permute.xlu0 3
          %1977 = vperm.xlu0 %1976, %v1582
          %v1978 = vpop.permute.xlu0 %1977
          %1980 = vset.pattern.permute.xlu0 3
          %1981 = vperm.xlu0 %1980, %v1583
          %v1982 = vpop.permute.xlu0 %1981
          %v1984 = vsel %vm1544, %v1954, 0.0
          %v1985 = vsel %vm1545, %v1954, 0.0
          %v1986 = vsel %vm1546, %v1954, 0.0
          %v1987 = vsel %vm1547, %v1954, 0.0
          %v1988 = vsel %vm1548, %v1958, 0.0
          %v1989 = vsel %vm1549, %v1958, 0.0
          %v1990 = vsel %vm1550, %v1958, 0.0
          %v1991 = vsel %vm1551, %v1958, 0.0
          %v1992 = vsel %vm1552, %v1962, 0.0
          %v1993 = vsel %vm1553, %v1962, 0.0
          %v1994 = vsel %vm1554, %v1962, 0.0
          %v1995 = vsel %vm1555, %v1962, 0.0
          %v1996 = vsel %vm1556, %v1966, 0.0
          %v1997 = vsel %vm1557, %v1966, 0.0
          %v1998 = vsel %vm1558, %v1966, 0.0
          %v1999 = vsel %vm1559, %v1966, 0.0
          %v2000 = vsel %vm1560, %v1970, 0.0
          %v2001 = vsel %vm1561, %v1970, 0.0
          %v2002 = vsel %vm1562, %v1970, 0.0
          %v2003 = vsel %vm1563, %v1970, 0.0
          %v2004 = vsel %vm1564, %v1974, 0.0
          %v2005 = vsel %vm1565, %v1974, 0.0
          %v2006 = vsel %vm1566, %v1974, 0.0
          %v2007 = vsel %vm1567, %v1974, 0.0
          %v2008 = vsel %vm1568, %v1978, 0.0
          %v2009 = vsel %vm1569, %v1978, 0.0
          %v2010 = vsel %vm1570, %v1978, 0.0
          %v2011 = vsel %vm1571, %v1978, 0.0
          %v2012 = vsel %vm1572, %v1982, 0.0
          %v2013 = vsel %vm1573, %v1982, 0.0
          %v2014 = vsel %vm1574, %v1982, 0.0
          %v2015 = vsel %vm1575, %v1982, 0.0
          %v2016 = vmax.f32 %v1984, %v1988
          %v2017 = vmax.f32 %v2016, %v1992
          %v2018 = vmax.f32 %v2017, %v1996
          %v2019 = vmax.f32 %v2018, %v2000
          %v2020 = vmax.f32 %v2019, %v2004
          %v2021 = vmax.f32 %v2020, %v2008
          %v2022 = vmax.f32 %v2021, %v2012
          %v2023 = vrot.slane %v2022, 4
          %v2024 = vmax.f32 %v2022, %v2023
          %v2025 = vrot.slane %v2024, 2
          %v2026 = vmax.f32 %v2024, %v2025
          %v2027 = vrot.slane %v2026, 1
          %v2028 = vmax.f32 %v2026, %v2027
          %v2029 = vmax.f32 %v1985, %v1989
          %v2030 = vmax.f32 %v2029, %v1993
          %v2031 = vmax.f32 %v2030, %v1997
          %v2032 = vmax.f32 %v2031, %v2001
          %v2033 = vmax.f32 %v2032, %v2005
          %v2034 = vmax.f32 %v2033, %v2009
          %v2035 = vmax.f32 %v2034, %v2013
          %v2036 = vrot.slane %v2035, 4
          %v2037 = vmax.f32 %v2035, %v2036
          %v2038 = vrot.slane %v2037, 2
          %v2039 = vmax.f32 %v2037, %v2038
          %v2040 = vrot.slane %v2039, 1
          %v2041 = vmax.f32 %v2039, %v2040
          %v2042 = vmax.f32 %v1986, %v1990
          %v2043 = vmax.f32 %v2042, %v1994
          %v2044 = vmax.f32 %v2043, %v1998
          %v2045 = vmax.f32 %v2044, %v2002
          %v2046 = vmax.f32 %v2045, %v2006
          %v2047 = vmax.f32 %v2046, %v2010
          %v2048 = vmax.f32 %v2047, %v2014
          %v2049 = vrot.slane %v2048, 4
          %v2050 = vmax.f32 %v2048, %v2049
          %v2051 = vrot.slane %v2050, 2
          %v2052 = vmax.f32 %v2050, %v2051
          %v2053 = vrot.slane %v2052, 1
          %v2054 = vmax.f32 %v2052, %v2053
          %v2055 = vmax.f32 %v1987, %v1991
          %v2056 = vmax.f32 %v2055, %v1995
          %v2057 = vmax.f32 %v2056, %v1999
          %v2058 = vmax.f32 %v2057, %v2003
          %v2059 = vmax.f32 %v2058, %v2007
          %v2060 = vmax.f32 %v2059, %v2011
          %v2061 = vmax.f32 %v2060, %v2015
          %v2062 = vrot.slane %v2061, 4
          %v2063 = vmax.f32 %v2061, %v2062
          %v2064 = vrot.slane %v2063, 2
          %v2065 = vmax.f32 %v2063, %v2064
          %v2066 = vrot.slane %v2065, 1
          %v2067 = vmax.f32 %v2065, %v2066
          %v2068 = vmax.f32 %v1508, %v2028
          %v2069 = vmax.f32 %v1509, %v2041
          %v2070 = vmax.f32 %v1510, %v2054
          %v2071 = vmax.f32 %v1511, %v2067
          %v2072 = vld [vmem:[%s325 + $0xc0] sm:$0xff]
          %v2073 = vld [vmem:[%s325 + $0xc8] sm:$0xff]
          %v2074 = vld [vmem:[%s325 + $0xd0] sm:$0xff]
          %v2075 = vld [vmem:[%s325 + $0xd8] sm:$0xff]
          %v2076 = vld [vmem:[%s325 + $0xe0] sm:$0xff]
          %v2077 = vld [vmem:[%s325 + $0xe8] sm:$0xff]
          %v2078 = vld [vmem:[%s325 + $0xf0] sm:$0xff]
          %v2079 = vld [vmem:[%s325 + $0xf8] sm:$0xff]
          %2080 = vset.pattern.permute.xlu0 0
          %2081 = vperm.xlu0 %2080, %v2072
          %v2082 = vpop.permute.xlu0 %2081
          %2083 = vset.pattern.permute.xlu0 0
          %2084 = vperm.xlu0 %2083, %v2073
          %v2085 = vpop.permute.xlu0 %2084
          %2086 = vset.pattern.permute.xlu0 0
          %2087 = vperm.xlu0 %2086, %v2074
          %v2088 = vpop.permute.xlu0 %2087
          %2089 = vset.pattern.permute.xlu0 0
          %2090 = vperm.xlu0 %2089, %v2075
          %v2091 = vpop.permute.xlu0 %2090
          %2092 = vset.pattern.permute.xlu0 0
          %2093 = vperm.xlu0 %2092, %v2076
          %v2094 = vpop.permute.xlu0 %2093
          %2095 = vset.pattern.permute.xlu0 0
          %2096 = vperm.xlu0 %2095, %v2077
          %v2097 = vpop.permute.xlu0 %2096
          %2098 = vset.pattern.permute.xlu0 0
          %2099 = vperm.xlu0 %2098, %v2078
          %v2100 = vpop.permute.xlu0 %2099
          %2101 = vset.pattern.permute.xlu0 0
          %2102 = vperm.xlu0 %2101, %v2079
          %v2103 = vpop.permute.xlu0 %2102
          %vm2104 = vcmp.eq.s32.totalorder %v2082, %v388
          %vm2105 = vcmp.eq.s32.totalorder %v2082, %v389
          %vm2106 = vcmp.eq.s32.totalorder %v2082, %v390
          %vm2107 = vcmp.eq.s32.totalorder %v2082, %v391
          %vm2108 = vcmp.eq.s32.totalorder %v2085, %v388
          %vm2109 = vcmp.eq.s32.totalorder %v2085, %v389
          %vm2110 = vcmp.eq.s32.totalorder %v2085, %v390
          %vm2111 = vcmp.eq.s32.totalorder %v2085, %v391
          %vm2112 = vcmp.eq.s32.totalorder %v2088, %v388
          %vm2113 = vcmp.eq.s32.totalorder %v2088, %v389
          %vm2114 = vcmp.eq.s32.totalorder %v2088, %v390
          %vm2115 = vcmp.eq.s32.totalorder %v2088, %v391
          %vm2116 = vcmp.eq.s32.totalorder %v2091, %v388
          %vm2117 = vcmp.eq.s32.totalorder %v2091, %v389
          %vm2118 = vcmp.eq.s32.totalorder %v2091, %v390
          %vm2119 = vcmp.eq.s32.totalorder %v2091, %v391
          %vm2120 = vcmp.eq.s32.totalorder %v2094, %v388
          %vm2121 = vcmp.eq.s32.totalorder %v2094, %v389
          %vm2122 = vcmp.eq.s32.totalorder %v2094, %v390
          %vm2123 = vcmp.eq.s32.totalorder %v2094, %v391
          %vm2124 = vcmp.eq.s32.totalorder %v2097, %v388
          %vm2125 = vcmp.eq.s32.totalorder %v2097, %v389
          %vm2126 = vcmp.eq.s32.totalorder %v2097, %v390
          %vm2127 = vcmp.eq.s32.totalorder %v2097, %v391
          %vm2128 = vcmp.eq.s32.totalorder %v2100, %v388
          %vm2129 = vcmp.eq.s32.totalorder %v2100, %v389
          %vm2130 = vcmp.eq.s32.totalorder %v2100, %v390
          %vm2131 = vcmp.eq.s32.totalorder %v2100, %v391
          %vm2132 = vcmp.eq.s32.totalorder %v2103, %v388
          %vm2133 = vcmp.eq.s32.totalorder %v2103, %v389
          %vm2134 = vcmp.eq.s32.totalorder %v2103, %v390
          %vm2135 = vcmp.eq.s32.totalorder %v2103, %v391
          %v2136 = vld [vmem:[%s355 + $0xc0] sm:$0xff]
          %v2137 = vld [vmem:[%s355 + $0xc8] sm:$0xff]
          %v2138 = vld [vmem:[%s355 + $0xd0] sm:$0xff]
          %v2139 = vld [vmem:[%s355 + $0xd8] sm:$0xff]
          %v2140 = vld [vmem:[%s355 + $0xe0] sm:$0xff]
          %v2141 = vld [vmem:[%s355 + $0xe8] sm:$0xff]
          %v2142 = vld [vmem:[%s355 + $0xf0] sm:$0xff]
          %v2143 = vld [vmem:[%s355 + $0xf8] sm:$0xff]
          %2145 = vset.pattern.permute.xlu0 0
          %2146 = vperm.xlu0 %2145, %v2136
          %v2147 = vpop.permute.xlu0 %2146
          %2150 = vset.pattern.permute.xlu0 0
          %2151 = vperm.xlu0 %2150, %v2137
          %v2152 = vpop.permute.xlu0 %2151
          %2155 = vset.pattern.permute.xlu0 0
          %2156 = vperm.xlu0 %2155, %v2138
          %v2157 = vpop.permute.xlu0 %2156
          %2160 = vset.pattern.permute.xlu0 0
          %2161 = vperm.xlu0 %2160, %v2139
          %v2162 = vpop.permute.xlu0 %2161
          %2165 = vset.pattern.permute.xlu0 0
          %2166 = vperm.xlu0 %2165, %v2140
          %v2167 = vpop.permute.xlu0 %2166
          %2170 = vset.pattern.permute.xlu0 0
          %2171 = vperm.xlu0 %2170, %v2141
          %v2172 = vpop.permute.xlu0 %2171
          %2175 = vset.pattern.permute.xlu0 0
          %2176 = vperm.xlu0 %2175, %v2142
          %v2177 = vpop.permute.xlu0 %2176
          %2180 = vset.pattern.permute.xlu0 0
          %2181 = vperm.xlu0 %2180, %v2143
          %v2182 = vpop.permute.xlu0 %2181
          %v2184 = vsel %vm2104, %v2147, 0.0
          %v2185 = vsel %vm2105, %v2147, 0.0
          %v2186 = vsel %vm2106, %v2147, 0.0
          %v2187 = vsel %vm2107, %v2147, 0.0
          %v2188 = vsel %vm2108, %v2152, 0.0
          %v2189 = vsel %vm2109, %v2152, 0.0
          %v2190 = vsel %vm2110, %v2152, 0.0
          %v2191 = vsel %vm2111, %v2152, 0.0
          %v2192 = vsel %vm2112, %v2157, 0.0
          %v2193 = vsel %vm2113, %v2157, 0.0
          %v2194 = vsel %vm2114, %v2157, 0.0
          %v2195 = vsel %vm2115, %v2157, 0.0
          %v2196 = vsel %vm2116, %v2162, 0.0
          %v2197 = vsel %vm2117, %v2162, 0.0
          %v2198 = vsel %vm2118, %v2162, 0.0
          %v2199 = vsel %vm2119, %v2162, 0.0
          %v2200 = vsel %vm2120, %v2167, 0.0
          %v2201 = vsel %vm2121, %v2167, 0.0
          %v2202 = vsel %vm2122, %v2167, 0.0
          %v2203 = vsel %vm2123, %v2167, 0.0
          %v2204 = vsel %vm2124, %v2172, 0.0
          %v2205 = vsel %vm2125, %v2172, 0.0
          %v2206 = vsel %vm2126, %v2172, 0.0
          %v2207 = vsel %vm2127, %v2172, 0.0
          %v2208 = vsel %vm2128, %v2177, 0.0
          %v2209 = vsel %vm2129, %v2177, 0.0
          %v2210 = vsel %vm2130, %v2177, 0.0
          %v2211 = vsel %vm2131, %v2177, 0.0
          %v2212 = vsel %vm2132, %v2182, 0.0
          %v2213 = vsel %vm2133, %v2182, 0.0
          %v2214 = vsel %vm2134, %v2182, 0.0
          %v2215 = vsel %vm2135, %v2182, 0.0
          %v2216 = vmax.f32 %v2184, %v2188
          %v2217 = vmax.f32 %v2216, %v2192
          %v2218 = vmax.f32 %v2217, %v2196
          %v2219 = vmax.f32 %v2218, %v2200
          %v2220 = vmax.f32 %v2219, %v2204
          %v2221 = vmax.f32 %v2220, %v2208
          %v2222 = vmax.f32 %v2221, %v2212
          %v2223 = vrot.slane %v2222, 4
          %v2224 = vmax.f32 %v2222, %v2223
          %v2225 = vrot.slane %v2224, 2
          %v2226 = vmax.f32 %v2224, %v2225
          %v2227 = vrot.slane %v2226, 1
          %v2228 = vmax.f32 %v2226, %v2227
          %v2229 = vmax.f32 %v2185, %v2189
          %v2230 = vmax.f32 %v2229, %v2193
          %v2231 = vmax.f32 %v2230, %v2197
          %v2232 = vmax.f32 %v2231, %v2201
          %v2233 = vmax.f32 %v2232, %v2205
          %v2234 = vmax.f32 %v2233, %v2209
          %v2235 = vmax.f32 %v2234, %v2213
          %v2236 = vrot.slane %v2235, 4
          %v2237 = vmax.f32 %v2235, %v2236
          %v2238 = vrot.slane %v2237, 2
          %v2239 = vmax.f32 %v2237, %v2238
          %v2240 = vrot.slane %v2239, 1
          %v2241 = vmax.f32 %v2239, %v2240
          %v2242 = vmax.f32 %v2186, %v2190
          %v2243 = vmax.f32 %v2242, %v2194
          %v2244 = vmax.f32 %v2243, %v2198
          %v2245 = vmax.f32 %v2244, %v2202
          %v2246 = vmax.f32 %v2245, %v2206
          %v2247 = vmax.f32 %v2246, %v2210
          %v2248 = vmax.f32 %v2247, %v2214
          %v2249 = vrot.slane %v2248, 4
          %v2250 = vmax.f32 %v2248, %v2249
          %v2251 = vrot.slane %v2250, 2
          %v2252 = vmax.f32 %v2250, %v2251
          %v2253 = vrot.slane %v2252, 1
          %v2254 = vmax.f32 %v2252, %v2253
          %v2255 = vmax.f32 %v2187, %v2191
          %v2256 = vmax.f32 %v2255, %v2195
          %v2257 = vmax.f32 %v2256, %v2199
          %v2258 = vmax.f32 %v2257, %v2203
          %v2259 = vmax.f32 %v2258, %v2207
          %v2260 = vmax.f32 %v2259, %v2211
          %v2261 = vmax.f32 %v2260, %v2215
          %v2262 = vrot.slane %v2261, 4
          %v2263 = vmax.f32 %v2261, %v2262
          %v2264 = vrot.slane %v2263, 2
          %v2265 = vmax.f32 %v2263, %v2264
          %v2266 = vrot.slane %v2265, 1
          %v2267 = vmax.f32 %v2265, %v2266
          %v2268 = vmax.f32 %v1708, %v2228
          %v2269 = vmax.f32 %v1709, %v2241
          %v2270 = vmax.f32 %v1710, %v2254
          %v2271 = vmax.f32 %v1711, %v2267
          %2272 = vset.pattern.permute.xlu0 1
          %2273 = vperm.xlu0 %2272, %v2136
          %v2274 = vpop.permute.xlu0 %2273
          %2276 = vset.pattern.permute.xlu0 1
          %2277 = vperm.xlu0 %2276, %v2137
          %v2278 = vpop.permute.xlu0 %2277
          %2280 = vset.pattern.permute.xlu0 1
          %2281 = vperm.xlu0 %2280, %v2138
          %v2282 = vpop.permute.xlu0 %2281
          %2284 = vset.pattern.permute.xlu0 1
          %2285 = vperm.xlu0 %2284, %v2139
          %v2286 = vpop.permute.xlu0 %2285
          %2288 = vset.pattern.permute.xlu0 1
          %2289 = vperm.xlu0 %2288, %v2140
          %v2290 = vpop.permute.xlu0 %2289
          %2292 = vset.pattern.permute.xlu0 1
          %2293 = vperm.xlu0 %2292, %v2141
          %v2294 = vpop.permute.xlu0 %2293
          %2296 = vset.pattern.permute.xlu0 1
          %2297 = vperm.xlu0 %2296, %v2142
          %v2298 = vpop.permute.xlu0 %2297
          %2300 = vset.pattern.permute.xlu0 1
          %2301 = vperm.xlu0 %2300, %v2143
          %v2302 = vpop.permute.xlu0 %2301
          %v2304 = vsel %vm2104, %v2274, 0.0
          %v2305 = vsel %vm2105, %v2274, 0.0
          %v2306 = vsel %vm2106, %v2274, 0.0
          %v2307 = vsel %vm2107, %v2274, 0.0
          %v2308 = vsel %vm2108, %v2278, 0.0
          %v2309 = vsel %vm2109, %v2278, 0.0
          %v2310 = vsel %vm2110, %v2278, 0.0
          %v2311 = vsel %vm2111, %v2278, 0.0
          %v2312 = vsel %vm2112, %v2282, 0.0
          %v2313 = vsel %vm2113, %v2282, 0.0
          %v2314 = vsel %vm2114, %v2282, 0.0
          %v2315 = vsel %vm2115, %v2282, 0.0
          %v2316 = vsel %vm2116, %v2286, 0.0
          %v2317 = vsel %vm2117, %v2286, 0.0
          %v2318 = vsel %vm2118, %v2286, 0.0
          %v2319 = vsel %vm2119, %v2286, 0.0
          %v2320 = vsel %vm2120, %v2290, 0.0
          %v2321 = vsel %vm2121, %v2290, 0.0
          %v2322 = vsel %vm2122, %v2290, 0.0
          %v2323 = vsel %vm2123, %v2290, 0.0
          %v2324 = vsel %vm2124, %v2294, 0.0
          %v2325 = vsel %vm2125, %v2294, 0.0
          %v2326 = vsel %vm2126, %v2294, 0.0
          %v2327 = vsel %vm2127, %v2294, 0.0
          %v2328 = vsel %vm2128, %v2298, 0.0
          %v2329 = vsel %vm2129, %v2298, 0.0
          %v2330 = vsel %vm2130, %v2298, 0.0
          %v2331 = vsel %vm2131, %v2298, 0.0
          %v2332 = vsel %vm2132, %v2302, 0.0
          %v2333 = vsel %vm2133, %v2302, 0.0
          %v2334 = vsel %vm2134, %v2302, 0.0
          %v2335 = vsel %vm2135, %v2302, 0.0
          %v2336 = vmax.f32 %v2304, %v2308
          %v2337 = vmax.f32 %v2336, %v2312
          %v2338 = vmax.f32 %v2337, %v2316
          %v2339 = vmax.f32 %v2338, %v2320
          %v2340 = vmax.f32 %v2339, %v2324
          %v2341 = vmax.f32 %v2340, %v2328
          %v2342 = vmax.f32 %v2341, %v2332
          %v2343 = vrot.slane %v2342, 4
          %v2344 = vmax.f32 %v2342, %v2343
          %v2345 = vrot.slane %v2344, 2
          %v2346 = vmax.f32 %v2344, %v2345
          %v2347 = vrot.slane %v2346, 1
          %v2348 = vmax.f32 %v2346, %v2347
          %v2349 = vmax.f32 %v2305, %v2309
          %v2350 = vmax.f32 %v2349, %v2313
          %v2351 = vmax.f32 %v2350, %v2317
          %v2352 = vmax.f32 %v2351, %v2321
          %v2353 = vmax.f32 %v2352, %v2325
          %v2354 = vmax.f32 %v2353, %v2329
          %v2355 = vmax.f32 %v2354, %v2333
          %v2356 = vrot.slane %v2355, 4
          %v2357 = vmax.f32 %v2355, %v2356
          %v2358 = vrot.slane %v2357, 2
          %v2359 = vmax.f32 %v2357, %v2358
          %v2360 = vrot.slane %v2359, 1
          %v2361 = vmax.f32 %v2359, %v2360
          %v2362 = vmax.f32 %v2306, %v2310
          %v2363 = vmax.f32 %v2362, %v2314
          %v2364 = vmax.f32 %v2363, %v2318
          %v2365 = vmax.f32 %v2364, %v2322
          %v2366 = vmax.f32 %v2365, %v2326
          %v2367 = vmax.f32 %v2366, %v2330
          %v2368 = vmax.f32 %v2367, %v2334
          %v2369 = vrot.slane %v2368, 4
          %v2370 = vmax.f32 %v2368, %v2369
          %v2371 = vrot.slane %v2370, 2
          %v2372 = vmax.f32 %v2370, %v2371
          %v2373 = vrot.slane %v2372, 1
          %v2374 = vmax.f32 %v2372, %v2373
          %v2375 = vmax.f32 %v2307, %v2311
          %v2376 = vmax.f32 %v2375, %v2315
          %v2377 = vmax.f32 %v2376, %v2319
          %v2378 = vmax.f32 %v2377, %v2323
          %v2379 = vmax.f32 %v2378, %v2327
          %v2380 = vmax.f32 %v2379, %v2331
          %v2381 = vmax.f32 %v2380, %v2335
          %v2382 = vrot.slane %v2381, 4
          %v2383 = vmax.f32 %v2381, %v2382
          %v2384 = vrot.slane %v2383, 2
          %v2385 = vmax.f32 %v2383, %v2384
          %v2386 = vrot.slane %v2385, 1
          %v2387 = vmax.f32 %v2385, %v2386
          %v2388 = vmax.f32 %v1828, %v2348
          %v2389 = vmax.f32 %v1829, %v2361
          %v2390 = vmax.f32 %v1830, %v2374
          %v2391 = vmax.f32 %v1831, %v2387
          %2392 = vset.pattern.permute.xlu0 2
          %2393 = vperm.xlu0 %2392, %v2136
          %v2394 = vpop.permute.xlu0 %2393
          %2396 = vset.pattern.permute.xlu0 2
          %2397 = vperm.xlu0 %2396, %v2137
          %v2398 = vpop.permute.xlu0 %2397
          %2400 = vset.pattern.permute.xlu0 2
          %2401 = vperm.xlu0 %2400, %v2138
          %v2402 = vpop.permute.xlu0 %2401
          %2404 = vset.pattern.permute.xlu0 2
          %2405 = vperm.xlu0 %2404, %v2139
          %v2406 = vpop.permute.xlu0 %2405
          %2408 = vset.pattern.permute.xlu0 2
          %2409 = vperm.xlu0 %2408, %v2140
          %v2410 = vpop.permute.xlu0 %2409
          %2412 = vset.pattern.permute.xlu0 2
          %2413 = vperm.xlu0 %2412, %v2141
          %v2414 = vpop.permute.xlu0 %2413
          %2416 = vset.pattern.permute.xlu0 2
          %2417 = vperm.xlu0 %2416, %v2142
          %v2418 = vpop.permute.xlu0 %2417
          %2420 = vset.pattern.permute.xlu0 2
          %2421 = vperm.xlu0 %2420, %v2143
          %v2422 = vpop.permute.xlu0 %2421
          %v2424 = vsel %vm2104, %v2394, 0.0
          %v2425 = vsel %vm2105, %v2394, 0.0
          %v2426 = vsel %vm2106, %v2394, 0.0
          %v2427 = vsel %vm2107, %v2394, 0.0
          %v2428 = vsel %vm2108, %v2398, 0.0
          %v2429 = vsel %vm2109, %v2398, 0.0
          %v2430 = vsel %vm2110, %v2398, 0.0
          %v2431 = vsel %vm2111, %v2398, 0.0
          %v2432 = vsel %vm2112, %v2402, 0.0
          %v2433 = vsel %vm2113, %v2402, 0.0
          %v2434 = vsel %vm2114, %v2402, 0.0
          %v2435 = vsel %vm2115, %v2402, 0.0
          %v2436 = vsel %vm2116, %v2406, 0.0
          %v2437 = vsel %vm2117, %v2406, 0.0
          %v2438 = vsel %vm2118, %v2406, 0.0
          %v2439 = vsel %vm2119, %v2406, 0.0
          %v2440 = vsel %vm2120, %v2410, 0.0
          %v2441 = vsel %vm2121, %v2410, 0.0
          %v2442 = vsel %vm2122, %v2410, 0.0
          %v2443 = vsel %vm2123, %v2410, 0.0
          %v2444 = vsel %vm2124, %v2414, 0.0
          %v2445 = vsel %vm2125, %v2414, 0.0
          %v2446 = vsel %vm2126, %v2414, 0.0
          %v2447 = vsel %vm2127, %v2414, 0.0
          %v2448 = vsel %vm2128, %v2418, 0.0
          %v2449 = vsel %vm2129, %v2418, 0.0
          %v2450 = vsel %vm2130, %v2418, 0.0
          %v2451 = vsel %vm2131, %v2418, 0.0
          %v2452 = vsel %vm2132, %v2422, 0.0
          %v2453 = vsel %vm2133, %v2422, 0.0
          %v2454 = vsel %vm2134, %v2422, 0.0
          %v2455 = vsel %vm2135, %v2422, 0.0
          %v2456 = vmax.f32 %v2424, %v2428
          %v2457 = vmax.f32 %v2456, %v2432
          %v2458 = vmax.f32 %v2457, %v2436
          %v2459 = vmax.f32 %v2458, %v2440
          %v2460 = vmax.f32 %v2459, %v2444
          %v2461 = vmax.f32 %v2460, %v2448
          %v2462 = vmax.f32 %v2461, %v2452
          %v2463 = vrot.slane %v2462, 4
          %v2464 = vmax.f32 %v2462, %v2463
          %v2465 = vrot.slane %v2464, 2
          %v2466 = vmax.f32 %v2464, %v2465
          %v2467 = vrot.slane %v2466, 1
          %v2468 = vmax.f32 %v2466, %v2467
          %v2469 = vmax.f32 %v2425, %v2429
          %v2470 = vmax.f32 %v2469, %v2433
          %v2471 = vmax.f32 %v2470, %v2437
          %v2472 = vmax.f32 %v2471, %v2441
          %v2473 = vmax.f32 %v2472, %v2445
          %v2474 = vmax.f32 %v2473, %v2449
          %v2475 = vmax.f32 %v2474, %v2453
          %v2476 = vrot.slane %v2475, 4
          %v2477 = vmax.f32 %v2475, %v2476
          %v2478 = vrot.slane %v2477, 2
          %v2479 = vmax.f32 %v2477, %v2478
          %v2480 = vrot.slane %v2479, 1
          %v2481 = vmax.f32 %v2479, %v2480
          %v2482 = vmax.f32 %v2426, %v2430
          %v2483 = vmax.f32 %v2482, %v2434
          %v2484 = vmax.f32 %v2483, %v2438
          %v2485 = vmax.f32 %v2484, %v2442
          %v2486 = vmax.f32 %v2485, %v2446
          %v2487 = vmax.f32 %v2486, %v2450
          %v2488 = vmax.f32 %v2487, %v2454
          %v2489 = vrot.slane %v2488, 4
          %v2490 = vmax.f32 %v2488, %v2489
          %v2491 = vrot.slane %v2490, 2
          %v2492 = vmax.f32 %v2490, %v2491
          %v2493 = vrot.slane %v2492, 1
          %v2494 = vmax.f32 %v2492, %v2493
          %v2495 = vmax.f32 %v2427, %v2431
          %v2496 = vmax.f32 %v2495, %v2435
          %v2497 = vmax.f32 %v2496, %v2439
          %v2498 = vmax.f32 %v2497, %v2443
          %v2499 = vmax.f32 %v2498, %v2447
          %v2500 = vmax.f32 %v2499, %v2451
          %v2501 = vmax.f32 %v2500, %v2455
          %v2502 = vrot.slane %v2501, 4
          %v2503 = vmax.f32 %v2501, %v2502
          %v2504 = vrot.slane %v2503, 2
          %v2505 = vmax.f32 %v2503, %v2504
          %v2506 = vrot.slane %v2505, 1
          %v2507 = vmax.f32 %v2505, %v2506
          %v2508 = vmax.f32 %v1948, %v2468
          %v2509 = vmax.f32 %v1949, %v2481
          %v2510 = vmax.f32 %v1950, %v2494
          %v2511 = vmax.f32 %v1951, %v2507
          %2512 = vset.pattern.permute.xlu0 3
          %2513 = vperm.xlu0 %2512, %v2136
          %v2514 = vpop.permute.xlu0 %2513
          %2516 = vset.pattern.permute.xlu0 3
          %2517 = vperm.xlu0 %2516, %v2137
          %v2518 = vpop.permute.xlu0 %2517
          %2520 = vset.pattern.permute.xlu0 3
          %2521 = vperm.xlu0 %2520, %v2138
          %v2522 = vpop.permute.xlu0 %2521
          %2524 = vset.pattern.permute.xlu0 3
          %2525 = vperm.xlu0 %2524, %v2139
          %v2526 = vpop.permute.xlu0 %2525
          %2528 = vset.pattern.permute.xlu0 3
          %2529 = vperm.xlu0 %2528, %v2140
          %v2530 = vpop.permute.xlu0 %2529
          %2532 = vset.pattern.permute.xlu0 3
          %2533 = vperm.xlu0 %2532, %v2141
          %v2534 = vpop.permute.xlu0 %2533
          %2536 = vset.pattern.permute.xlu0 3
          %2537 = vperm.xlu0 %2536, %v2142
          %v2538 = vpop.permute.xlu0 %2537
          %2540 = vset.pattern.permute.xlu0 3
          %2541 = vperm.xlu0 %2540, %v2143
          %v2542 = vpop.permute.xlu0 %2541
          %v2544 = vsel %vm2104, %v2514, 0.0
          %v2545 = vsel %vm2105, %v2514, 0.0
          %v2546 = vsel %vm2106, %v2514, 0.0
          %v2547 = vsel %vm2107, %v2514, 0.0
          %v2548 = vsel %vm2108, %v2518, 0.0
          %v2549 = vsel %vm2109, %v2518, 0.0
          %v2550 = vsel %vm2110, %v2518, 0.0
          %v2551 = vsel %vm2111, %v2518, 0.0
          %v2552 = vsel %vm2112, %v2522, 0.0
          %v2553 = vsel %vm2113, %v2522, 0.0
          %v2554 = vsel %vm2114, %v2522, 0.0
          %v2555 = vsel %vm2115, %v2522, 0.0
          %v2556 = vsel %vm2116, %v2526, 0.0
          %v2557 = vsel %vm2117, %v2526, 0.0
          %v2558 = vsel %vm2118, %v2526, 0.0
          %v2559 = vsel %vm2119, %v2526, 0.0
          %v2560 = vsel %vm2120, %v2530, 0.0
          %v2561 = vsel %vm2121, %v2530, 0.0
          %v2562 = vsel %vm2122, %v2530, 0.0
          %v2563 = vsel %vm2123, %v2530, 0.0
          %v2564 = vsel %vm2124, %v2534, 0.0
          %v2565 = vsel %vm2125, %v2534, 0.0
          %v2566 = vsel %vm2126, %v2534, 0.0
          %v2567 = vsel %vm2127, %v2534, 0.0
          %v2568 = vsel %vm2128, %v2538, 0.0
          %v2569 = vsel %vm2129, %v2538, 0.0
          %v2570 = vsel %vm2130, %v2538, 0.0
          %v2571 = vsel %vm2131, %v2538, 0.0
          %v2572 = vsel %vm2132, %v2542, 0.0
          %v2573 = vsel %vm2133, %v2542, 0.0
          %v2574 = vsel %vm2134, %v2542, 0.0
          %v2575 = vsel %vm2135, %v2542, 0.0
          %v2576 = vmax.f32 %v2544, %v2548
          %v2577 = vmax.f32 %v2576, %v2552
          %v2578 = vmax.f32 %v2577, %v2556
          %v2579 = vmax.f32 %v2578, %v2560
          %v2580 = vmax.f32 %v2579, %v2564
          %v2581 = vmax.f32 %v2580, %v2568
          %v2582 = vmax.f32 %v2581, %v2572
          %v2583 = vrot.slane %v2582, 4
          %v2584 = vmax.f32 %v2582, %v2583
          %v2585 = vrot.slane %v2584, 2
          %v2586 = vmax.f32 %v2584, %v2585
          %v2587 = vrot.slane %v2586, 1
          %v2588 = vmax.f32 %v2586, %v2587
          %v2589 = vmax.f32 %v2545, %v2549
          %v2590 = vmax.f32 %v2589, %v2553
          %v2591 = vmax.f32 %v2590, %v2557
          %v2592 = vmax.f32 %v2591, %v2561
          %v2593 = vmax.f32 %v2592, %v2565
          %v2594 = vmax.f32 %v2593, %v2569
          %v2595 = vmax.f32 %v2594, %v2573
          %v2596 = vrot.slane %v2595, 4
          %v2597 = vmax.f32 %v2595, %v2596
          %v2598 = vrot.slane %v2597, 2
          %v2599 = vmax.f32 %v2597, %v2598
          %v2600 = vrot.slane %v2599, 1
          %v2601 = vmax.f32 %v2599, %v2600
          %v2602 = vmax.f32 %v2546, %v2550
          %v2603 = vmax.f32 %v2602, %v2554
          %v2604 = vmax.f32 %v2603, %v2558
          %v2605 = vmax.f32 %v2604, %v2562
          %v2606 = vmax.f32 %v2605, %v2566
          %v2607 = vmax.f32 %v2606, %v2570
          %v2608 = vmax.f32 %v2607, %v2574
          %v2609 = vrot.slane %v2608, 4
          %v2610 = vmax.f32 %v2608, %v2609
          %v2611 = vrot.slane %v2610, 2
          %v2612 = vmax.f32 %v2610, %v2611
          %v2613 = vrot.slane %v2612, 1
          %v2614 = vmax.f32 %v2612, %v2613
          %v2615 = vmax.f32 %v2547, %v2551
          %v2616 = vmax.f32 %v2615, %v2555
          %v2617 = vmax.f32 %v2616, %v2559
          %v2618 = vmax.f32 %v2617, %v2563
          %v2619 = vmax.f32 %v2618, %v2567
          %v2620 = vmax.f32 %v2619, %v2571
          %v2621 = vmax.f32 %v2620, %v2575
          %v2622 = vrot.slane %v2621, 4
          %v2623 = vmax.f32 %v2621, %v2622
          %v2624 = vrot.slane %v2623, 2
          %v2625 = vmax.f32 %v2623, %v2624
          %v2626 = vrot.slane %v2625, 1
          %v2627 = vmax.f32 %v2625, %v2626
          %v2628 = vmax.f32 %v2068, %v2588
          %v2629 = vmax.f32 %v2069, %v2601
          %v2630 = vmax.f32 %v2070, %v2614
          %v2631 = vmax.f32 %v2071, %v2627
          %v2632 = vld [vmem:[#allocation2] ss:$4 sm:$0xf]
          %v2637 = vcombine.low %v2268, %v2269
          %v2638 = vcombine.low %v2270, %v2271
          %v2640 = vunpack.c.l.s4 1966171168
          %v2641 = vunpack.c.0.s8 %v2640
          %v2642 = vlaneseq
          %v2643 = vshrl.u32 %v2642, 7
          %v2644 = vsub.s32 %v2641, %v2643
          %v2645 = vrot.slane %v2637, %v2644
          %v2647 = vunpack.c.l.s4 1966171168
          %v2648 = vunpack.c.0.s8 %v2647
          %v2649 = vlaneseq
          %v2650 = vshrl.u32 %v2649, 7
          %v2651 = vsub.s32 %v2648, %v2650
          %v2652 = vrot.slane %v2638, %v2651
          %v2653 = vcombine.low %v2645, %v2652
          %v2655 = vunpack.c.l.s4 1966171168
          %v2656 = vunpack.c.0.s8 %v2655
          %v2657 = vlaneseq
          %v2658 = vshrl.u32 %v2657, 7
          %v2659 = vsub.s32 %v2656, %v2658
          %v2660 = vrot.slane %v2653, %v2659
          %v2662 = vmax.f32 %v2632, %v2660
          %v2663 = vlaneseq
          %vm2664 = vcmp.ge.s32.totalorder %v2663, 0
          %vm2665 = vcmp.lt.s32.totalorder %v2663, 512
          %vm2666 = vmand %vm2664, %vm2665
          %2667 = vst.msk [vmem:[#allocation2] ss:$4 sm:$0xf] %vm2666, %v2662
          %s2668 = scalar_lea.vmem [#allocation2], 1
          %v2669 = vld [vmem:[%s2668] ss:$4 sm:$0xf]
          %v2674 = vcombine.low %v2388, %v2389
          %v2675 = vcombine.low %v2390, %v2391
          %v2677 = vunpack.c.l.s4 1966171168
          %v2678 = vunpack.c.0.s8 %v2677
          %v2679 = vlaneseq
          %v2680 = vshrl.u32 %v2679, 7
          %v2681 = vsub.s32 %v2678, %v2680
          %v2682 = vrot.slane %v2674, %v2681
          %v2684 = vunpack.c.l.s4 1966171168
          %v2685 = vunpack.c.0.s8 %v2684
          %v2686 = vlaneseq
          %v2687 = vshrl.u32 %v2686, 7
          %v2688 = vsub.s32 %v2685, %v2687
          %v2689 = vrot.slane %v2675, %v2688
          %v2690 = vcombine.low %v2682, %v2689
          %v2692 = vunpack.c.l.s4 1966171168
          %v2693 = vunpack.c.0.s8 %v2692
          %v2694 = vlaneseq
          %v2695 = vshrl.u32 %v2694, 7
          %v2696 = vsub.s32 %v2693, %v2695
          %v2697 = vrot.slane %v2690, %v2696
          %v2699 = vmax.f32 %v2669, %v2697
          %2700 = vst.msk [vmem:[%s2668] ss:$4 sm:$0xf] %vm2666, %v2699
          %s2701 = scalar_lea.vmem [#allocation2], 2
          %v2702 = vld [vmem:[%s2701] ss:$4 sm:$0xf]
          %v2707 = vcombine.low %v2508, %v2509
          %v2708 = vcombine.low %v2510, %v2511
          %v2710 = vunpack.c.l.s4 1966171168
          %v2711 = vunpack.c.0.s8 %v2710
          %v2712 = vlaneseq
          %v2713 = vshrl.u32 %v2712, 7
          %v2714 = vsub.s32 %v2711, %v2713
          %v2715 = vrot.slane %v2707, %v2714
          %v2717 = vunpack.c.l.s4 1966171168
          %v2718 = vunpack.c.0.s8 %v2717
          %v2719 = vlaneseq
          %v2720 = vshrl.u32 %v2719, 7
          %v2721 = vsub.s32 %v2718, %v2720
          %v2722 = vrot.slane %v2708, %v2721
          %v2723 = vcombine.low %v2715, %v2722
          %v2725 = vunpack.c.l.s4 1966171168
          %v2726 = vunpack.c.0.s8 %v2725
          %v2727 = vlaneseq
          %v2728 = vshrl.u32 %v2727, 7
          %v2729 = vsub.s32 %v2726, %v2728
          %v2730 = vrot.slane %v2723, %v2729
          %v2732 = vmax.f32 %v2702, %v2730
          %2733 = vst.msk [vmem:[%s2701] ss:$4 sm:$0xf] %vm2666, %v2732
          %s2734 = scalar_lea.vmem [#allocation2], 3
          %v2735 = vld [vmem:[%s2734] ss:$4 sm:$0xf]
          %v2740 = vcombine.low %v2628, %v2629
          %v2741 = vcombine.low %v2630, %v2631
          %v2743 = vunpack.c.l.s4 1966171168
          %v2744 = vunpack.c.0.s8 %v2743
          %v2745 = vlaneseq
          %v2746 = vshrl.u32 %v2745, 7
          %v2747 = vsub.s32 %v2744, %v2746
          %v2748 = vrot.slane %v2740, %v2747
          %v2750 = vunpack.c.l.s4 1966171168
          %v2751 = vunpack.c.0.s8 %v2750
          %v2752 = vlaneseq
          %v2753 = vshrl.u32 %v2752, 7
          %v2754 = vsub.s32 %v2751, %v2753
          %v2755 = vrot.slane %v2741, %v2754
          %v2756 = vcombine.low %v2748, %v2755
          %v2758 = vunpack.c.l.s4 1966171168
          %v2759 = vunpack.c.0.s8 %v2758
          %v2760 = vlaneseq
          %v2761 = vshrl.u32 %v2760, 7
          %v2762 = vsub.s32 %v2759, %v2761
          %v2763 = vrot.slane %v2756, %v2762
          %v2765 = vmax.f32 %v2735, %v2763
          %2766 = vst.msk [vmem:[%s2734] ss:$4 sm:$0xf] %vm2666, %v2765
        $region36: #{tpu_custom_call.1} parent=27 // pred_fallthru
          _
        %p2767 = scmp.eq.s32.totalorder %s35, 2
        // Predicated region
        $region37: #{tpu_custom_call.1} parent=27 // pred_check
          %p2768 = pneg %p2767
        $region38: #{tpu_custom_call.1} parent=27 // pred_check_branch
          %2770 = sbr.rel (%p2768) target = $region40
        $region39: #{tpu_custom_call.1} parent=27 // pred_region
          %v2771 = vld [vmem:[#allocation2] sm:$0xff]
          %v2772 = vld [vmem:[#allocation2 + $0x8] sm:$0xff]
          %2773 = vst [vmem:[%s306] sm:$0xff] %v2771
          %2774 = vst [vmem:[%s306 + $0x8] sm:$0xff] %v2772
        $region40: #{tpu_custom_call.1} parent=27 // pred_fallthru
          _
        %s2775 = sand.u32 %s153, 1
        %s2776 = scalar_lea.sflag [#allocation7], %s2775
        %s2777 = sand.u32 %s153, 1
        %s2778 = smul.addr %s2777, 16
        %s2779 = scalar_lea.vmem [#allocation6], %s2778
        // Predicated region
        $region41: #{tpu_custom_call.1} parent=27 // pred_check
          %p2780 = pneg %p163
        $region42: #{tpu_custom_call.1} parent=27 // pred_check_branch
          %2782 = sbr.rel (%p2780) target = $region44
        $region43: #{tpu_custom_call.1} parent=27 // pred_region
          %s2783 = smul.u32 4, %s34
          %s2785 = ssub.s32 256, 256
          %2786 = vsyncadd %s2776, %s2785
          %s2787 = smul.addr %s33, 16
          %s2788 = sadd.s32 %s2783, %s2787
          %s2789 = smul.addr %s2788, 64
          %s2790 = scalar_lea.hbm %s4, %s2789
          %s2792 = sshll.u32 %s2779, 4
          %s2793 = int_to_ptr.vmem [resolvable:$true] %s2792
          %2795 = dma.vmem_to_hbm [thread:$0]  %s2793, 256, %s2790, %s2776
        $region44: #{tpu_custom_call.1} parent=27 // pred_fallthru
          _
      $region28: #{tpu_custom_call.1} parent=5 // pred_fallthru
        _
      %p2796 = scmp.le.s32.totalorder 2, %s23
      // Predicated region
      $region45: #{tpu_custom_call.1} parent=5 // pred_check
        %p2797 = pneg %p2796
      $region46: #{tpu_custom_call.1} parent=5 // pred_check_branch
        %2799 = sbr.rel (%p2797) target = $region48
      $region47: #{tpu_custom_call.1} parent=5 // pred_region
        %s2800 = ssub.s32 %s23, 2
        // Predicated region
        $region49: #{tpu_custom_call.1} parent=47 // pred_check
          %p2801 = pneg %p169
        $region50: #{tpu_custom_call.1} parent=47 // pred_check_branch
          %2803 = sbr.rel (%p2801) target = $region52
        $region51: #{tpu_custom_call.1} parent=47 // pred_region
          %s2804 = sand.u32 %s154, 1
          %s2805 = scalar_lea.sflag [#allocation7], %s2804
          %s2806 = sand.u32 %s154, 1
          %s2807 = smul.addr %s2806, 16
          %s2808 = scalar_lea.vmem [#allocation6], %s2807
          %2809 = dma.done %s2805, 256
        $region52: #{tpu_custom_call.1} parent=47 // pred_fallthru
          _
      $region48: #{tpu_custom_call.1} parent=5 // pred_fallthru
        _
    $region6: #{tpu_custom_call.1} parent=1 // loop_footer
      %s27 = sadd.s32 1, %s23
    $region7: #{tpu_custom_call.1} parent=1 // loop_footer_branch
      %22 = sbr.rel target = $region3
    $region8: #{tpu_custom_call.1} parent=1 // loop_exit
      _
    %2810 = vsyncpa [#allocation7], 1
    %s2811 = scalar_lea.sflag [#allocation7], 1
    %2812 = vsyncpa %s2811, 1

</llo_original>
